<compile_context>
chip_gen: v7x
topology: tpu7x:2x2x1
jax: 0.10.0
libtpu: 0.0.40
codegen_flags: <defaults>
</compile_context>

<pallas_src>
import functools
import math

import numpy as np

import jax
import jax.numpy as jnp
from jax.experimental import pallas as pl
from jax.experimental.pallas import tpu as pltpu


def _round_up(x, m):
    return ((x + m - 1) // m) * m


def cross_attn_kernel(tgt_ref, qin_ref, kin_ref, val_ref,
                      wq_ref, bq_ref, wk_ref, bk_ref, wv_ref, bv_ref,
                      wo_ref, bo_ref, g_ref, beta_ref,
                      o_ref,
                      kh_ref, vh_ref,
                      *, nhead, eps, compute_dtype):
    _, tq, e = o_ref.shape
    dh = e // nhead
    scale = 1.0 / math.sqrt(dh)
    approx = np.dtype(compute_dtype) != np.dtype(np.float32)

    # ---- K / V projections: once per batch element (the query-tile axis is
    # the inner grid axis), cached in VMEM scratch in the MXU compute dtype.
    @pl.when(pl.program_id(1) == 0)
    def _():
        kin = kin_ref[0].astype(compute_dtype)                     # (Lk, E)
        val = val_ref[0].astype(compute_dtype)                     # (Lk, E)
        k = jnp.dot(kin, wk_ref[...],
                    preferred_element_type=jnp.float32) + bk_ref[...]
        v = jnp.dot(val, wv_ref[...],
                    preferred_element_type=jnp.float32) + bv_ref[...]
        kh_ref[...] = k.astype(kh_ref.dtype)
        vh_ref[...] = v.astype(vh_ref.dtype)

    # ---- Q projection for this query tile (scaled by 1/sqrt(head_dim)).
    qin = qin_ref[0].astype(compute_dtype)                          # (TQ, E)
    q = jnp.dot(qin, wq_ref[...], preferred_element_type=jnp.float32)
    q = (q + bq_ref[...]) * scale                                   # f32 (TQ, E)

    kh = kh_ref[...]                                                # (Lk, E)
    vh = vh_ref[...]                                                # (Lk, E)
    wo = wo_ref[...]                                                # (E,  E)

    # ---- per-head attention; the output projection is accumulated per head
    # so no lane-dim concatenation of the head contexts is needed.
    out = jnp.zeros((tq, e), jnp.float32) + bo_ref[...]             # (TQ, E)
    for h in range(nhead):
        sl = slice(h * dh, (h + 1) * dh)
        q_h = q[:, sl].astype(compute_dtype)                        # (TQ, dh)
        k_h = kh[:, sl]                                             # (Lk, dh)
        v_h = vh[:, sl]                                             # (Lk, dh)
        # scores = q_h @ k_h^T, f32 accumulation on the MXU.
        s = jax.lax.dot_general(q_h, k_h, (((1,), (1,)), ((), ())),
                                preferred_element_type=jnp.float32)  # (TQ, Lk)
        m = jnp.max(s, axis=-1, keepdims=True)
        p = jnp.exp(s - m)
        denom = jnp.sum(p, axis=-1, keepdims=True)
        ctx = jnp.dot(p.astype(compute_dtype), v_h,
                      preferred_element_type=jnp.float32)            # (TQ, dh)
        ctx = ctx * pl.reciprocal(denom, approx=approx)              # EUP recip
        out = out + jnp.dot(ctx.astype(compute_dtype), wo[sl, :],
                            preferred_element_type=jnp.float32)      # (TQ, E)

    # ---- residual + LayerNorm (fused single-pass statistics), all f32.
    t = tgt_ref[0].astype(jnp.float32) + out
    s1 = jnp.sum(t, axis=-1, keepdims=True)
    s2 = jnp.sum(t * t, axis=-1, keepdims=True)
    mean = s1 * (1.0 / e)
    var = jnp.maximum(s2 * (1.0 / e) - mean * mean, 0.0)
    norm = (t - mean) * jax.lax.rsqrt(var + eps)
    o_ref[0] = (norm * g_ref[...] + beta_ref[...]).astype(o_ref.dtype)


def cross_attention_layer_forward(tgt, memory, params, *, nhead,
                                  query_pos=None, pos=None, eps=1e-5,
                                  tq=256, compute_dtype=jnp.bfloat16):
    """CrossAttentionLayer.forward_post.  tgt: (B, Lq, E), memory: (B, Lk, E)."""
    wq, wk, wv, bq, bk, bv, wo, bo, gamma, beta = params
    B, Lq, E = tgt.shape
    Lk = memory.shape[1]
    assert E % nhead == 0, "d_model must be divisible by nhead"

    # with_pos_embed
    q_in = tgt if query_pos is None else tgt + query_pos
    k_in = memory if pos is None else memory + pos

    # Query row tile: multiple of 8 sublanes, default 256 (MXU-aligned on
    # v6e/v7x); Lq is padded to a whole number of tiles, tail sliced off below.
    tq = _round_up(max(tq, 8), 8)
    tq_eff = min(tq, _round_up(Lq, 8))
    lq_pad = _round_up(Lq, tq_eff)
    if lq_pad != Lq:
        pad = ((0, 0), (0, lq_pad - Lq), (0, 0))
        tgt_p = jnp.pad(tgt, pad)
        qin_p = jnp.pad(q_in, pad)
    else:
        tgt_p, qin_p = tgt, q_in

    # MXU operands in compute_dtype (bf16 by default, cast once here); biases
    # and LayerNorm parameters stay f32 and are applied to f32 accumulators.
    wq_c, wk_c, wv_c, wo_c = (w.astype(compute_dtype) for w in (wq, wk, wv, wo))
    bq2, bk2, bv2, bo2, g2, be2 = (
        v.reshape(1, E).astype(jnp.float32)
        for v in (bq, bk, bv, bo, gamma, beta))

    grid = (B, lq_pad // tq_eff)

    tok_spec = pl.BlockSpec((1, tq_eff, E), lambda b, qi: (b, qi, 0))
    mem_spec = pl.BlockSpec((1, Lk, E), lambda b, qi: (b, 0, 0))
    # Weight/bias blocks have constant index maps, so they are not re-DMA'd
    # across grid steps; at 4*E*E they are a negligible VMEM overhead here.
    w_spec = pl.BlockSpec((E, E), lambda b, qi: (0, 0))
    vec_spec = pl.BlockSpec((1, E), lambda b, qi: (0, 0))

    # Explicit scoped-VMEM budget: streamed token tiles are double-buffered,
    # memory blocks / weights / K-V scratch are effectively resident.
    in_b = np.dtype(tgt.dtype).itemsize
    cd_b = np.dtype(compute_dtype).itemsize
    est = (2 * 3 * tq_eff * E * in_b            # tgt / q_in / out tiles (2x buf)
           + 2 * 2 * Lk * E * in_b              # k_in / value blocks
           + 2 * (4 * E * E * cd_b + 6 * E * 4) # weights + bias/LN vectors
           + 2 * Lk * E * cd_b)                 # cached K/V projections
    vmem_limit = int(max(32 * 2**20, min(2 * est + (2 << 20), 48 * 2**20)))

    kernel = functools.partial(cross_attn_kernel, nhead=nhead, eps=eps,
                               compute_dtype=compute_dtype)

    out = pl.pallas_call(
        kernel,
        out_shape=jax.ShapeDtypeStruct((B, lq_pad, E), tgt.dtype),
        grid_spec=pltpu.PrefetchScalarGridSpec(
            num_scalar_prefetch=0,
            grid=grid,
            in_specs=[
                tok_spec,            # tgt (residual)
                tok_spec,            # tgt + query_pos   (queries)
                mem_spec,            # memory + pos      (keys)
                mem_spec,            # memory            (values)
                w_spec, vec_spec,    # Wq, bq
                w_spec, vec_spec,    # Wk, bk
                w_spec, vec_spec,    # Wv, bv
                w_spec, vec_spec,    # Wo, bo
                vec_spec, vec_spec,  # LayerNorm gamma, beta
            ],
            out_specs=pl.BlockSpec((1, tq_eff, E), lambda b, qi: (b, qi, 0)),
            scratch_shapes=[
                pltpu.VMEM((Lk, E), compute_dtype),   # cached K projection
                pltpu.VMEM((Lk, E), compute_dtype),   # cached V projection
            ],
        ),
        compiler_params=pltpu.CompilerParams(
            dimension_semantics=("parallel", "arbitrary"),
            vmem_limit_bytes=vmem_limit),
    )(tgt_p, qin_p, k_in, memory,
      wq_c, bq2, wk_c, bk2, wv_c, bv2, wo_c, bo2, g2, be2)

    return out[:, :Lq, :]


def init_params(key, d_model):
    """Parameter shapes/semantics of nn.MultiheadAttention + LayerNorm.

    Projection weights: xavier_uniform (as in _reset_parameters), stored
    pre-transposed as (in_features, out_features).  In PyTorch the attention
    biases are zero and LayerNorm is (1, 0); small random values are used here
    so the kernel's bias / affine paths are actually exercised.
    """
    E = d_model
    ks = jax.random.split(key, 10)

    def xavier(k, fan_in, fan_out, shape):
        bound = (6.0 / (fan_in + fan_out)) ** 0.5
        return jax.random.uniform(k, shape, jnp.float32, -bound, bound)

    # in_proj_weight is (3E, E) in torch -> xavier fans are (E, 3E).
    wq = xavier(ks[0], E, 3 * E, (E, E))
    wk = xavier(ks[1], E, 3 * E, (E, E))
    wv = xavier(ks[2], E, 3 * E, (E, E))
    wo = xavier(ks[3], E, E, (E, E))
    bq = 0.02 * jax.random.normal(ks[4], (E,), jnp.float32)
    bk = 0.02 * jax.random.normal(ks[5], (E,), jnp.float32)
    bv = 0.02 * jax.random.normal(ks[6], (E,), jnp.float32)
    bo = 0.02 * jax.random.normal(ks[7], (E,), jnp.float32)
    gamma = 1.0 + 0.1 * jax.random.normal(ks[8], (E,), jnp.float32)
    beta = 0.1 * jax.random.normal(ks[9], (E,), jnp.float32)
    return wq, wk, wv, bq, bk, bv, wo, bo, gamma, beta


def cross_attention_ref(tgt, memory, params, *, nhead, query_pos=None, pos=None,
                        eps=1e-5):
    """Pure-JAX reference for CrossAttentionLayer.forward_post (dropout=0)."""
    wq, wk, wv, bq, bk, bv, wo, bo, gamma, beta = params
    B, Lq, E = tgt.shape
    Lk = memory.shape[1]
    dh = E // nhead
    q_in = tgt if query_pos is None else tgt + query_pos
    k_in = memory if pos is None else memory + pos
    q = (q_in @ wq + bq).reshape(B, Lq, nhead, dh).transpose(0, 2, 1, 3)
    k = (k_in @ wk + bk).reshape(B, Lk, nhead, dh).transpose(0, 2, 1, 3)
    v = (memory @ wv + bv).reshape(B, Lk, nhead, dh).transpose(0, 2, 1, 3)
    s = jnp.einsum("bhqd,bhkd->bhqk", q, k) / math.sqrt(dh)
    p = jax.nn.softmax(s, axis=-1)
    ctx = jnp.einsum("bhqk,bhkd->bhqd", p, v)
    ctx = ctx.transpose(0, 2, 1, 3).reshape(B, Lq, E)
    t = tgt + (ctx @ wo + bo)                 # dropout(p=0.0) == identity
    mean = t.mean(-1, keepdims=True)
    var = jnp.mean((t - mean) ** 2, -1, keepdims=True)
    return (t - mean) * jax.lax.rsqrt(var + eps) * gamma + beta


if __name__ == "__main__":
    d_model, nhead = 32, 4
    B, Lq, Lk = 2, 8, 16

    key = jax.random.PRNGKey(0)
    k_tgt, k_mem, k_qp, k_pos, k_par = jax.random.split(key, 5)
    tgt = jax.random.normal(k_tgt, (B, Lq, d_model), jnp.float32)
    memory = jax.random.normal(k_mem, (B, Lk, d_model), jnp.float32)
    query_pos = jax.random.normal(k_qp, (B, Lq, d_model), jnp.float32)
    pos = jax.random.normal(k_pos, (B, Lk, d_model), jnp.float32)
    params = init_params(k_par, d_model)

    with jax.default_matmul_precision("float32"):
        ref = cross_attention_ref(tgt, memory, params, nhead=nhead,
                                  query_pos=query_pos, pos=pos)

    # f32 MXU operands: near-reference accuracy.
    out_f32 = cross_attention_layer_forward(
        tgt, memory, params, nhead=nhead, query_pos=query_pos, pos=pos,
        compute_dtype=jnp.float32)
    out_f32 = jax.block_until_ready(out_f32)
    assert out_f32.shape == (B, Lq, d_model)
    assert jnp.allclose(out_f32, ref, atol=3e-2, rtol=3e-2), "f32 mismatch"

    # Default fast path: bf16 MXU operands with f32 accumulation.
    out_bf16 = cross_attention_layer_forward(
        tgt, memory, params, nhead=nhead, query_pos=query_pos, pos=pos)
    out_bf16 = jax.block_until_ready(out_bf16)
    assert out_bf16.shape == (B, Lq, d_model)
    assert jnp.allclose(out_bf16, ref, atol=6e-2, rtol=6e-2), "bf16 mismatch"

    print("KERNEL_OK")
</pallas_src>

<mosaic_0001>
module attributes {stable_mosaic.version = 11 : i64} {
  func.func @cross_attn_kernel(%arg0: i32, %arg1: i32, %arg2: memref<1x8x32xf32, #tpu.memory_space<vmem>>, %arg3: memref<1x8x32xf32, #tpu.memory_space<vmem>>, %arg4: memref<1x16x32xf32, #tpu.memory_space<vmem>>, %arg5: memref<1x16x32xf32, #tpu.memory_space<vmem>>, %arg6: memref<32x32xf32, #tpu.memory_space<vmem>>, %arg7: memref<1x32xf32, #tpu.memory_space<vmem>>, %arg8: memref<32x32xf32, #tpu.memory_space<vmem>>, %arg9: memref<1x32xf32, #tpu.memory_space<vmem>>, %arg10: memref<32x32xf32, #tpu.memory_space<vmem>>, %arg11: memref<1x32xf32, #tpu.memory_space<vmem>>, %arg12: memref<32x32xf32, #tpu.memory_space<vmem>>, %arg13: memref<1x32xf32, #tpu.memory_space<vmem>>, %arg14: memref<1x32xf32, #tpu.memory_space<vmem>>, %arg15: memref<1x32xf32, #tpu.memory_space<vmem>>, %arg16: memref<1x8x32xf32, #tpu.memory_space<vmem>>, %arg17: memref<16x32xf32, #tpu.memory_space<vmem>>, %arg18: memref<16x32xf32, #tpu.memory_space<vmem>>) attributes {dimension_semantics = [#tpu.dimension_semantics<parallel>, #tpu.dimension_semantics<arbitrary>], iteration_bounds = array<i64: 2, 1>, scalar_prefetch = 0 : i64, scratch_operands = 2 : i64, tpu.core_type = #tpu.core_type<tc>, window_params = [{transform_indices = @transform_0, window_bounds = array<i64: 1, 8, 32>}, {transform_indices = @transform_1, window_bounds = array<i64: 1, 8, 32>}, {transform_indices = @transform_2, window_bounds = array<i64: 1, 16, 32>}, {transform_indices = @transform_3, window_bounds = array<i64: 1, 16, 32>}, {pipeline_mode = #tpu.pipeline_mode<synchronous>, transform_indices = @transform_4, window_bounds = array<i64: 32, 32>}, {pipeline_mode = #tpu.pipeline_mode<synchronous>, transform_indices = @transform_5, window_bounds = array<i64: 1, 32>}, {pipeline_mode = #tpu.pipeline_mode<synchronous>, transform_indices = @transform_6, window_bounds = array<i64: 32, 32>}, {pipeline_mode = #tpu.pipeline_mode<synchronous>, transform_indices = @transform_7, window_bounds = array<i64: 1, 32>}, {pipeline_mode = #tpu.pipeline_mode<synchronous>, transform_indices = @transform_8, window_bounds = array<i64: 32, 32>}, {pipeline_mode = #tpu.pipeline_mode<synchronous>, transform_indices = @transform_9, window_bounds = array<i64: 1, 32>}, {pipeline_mode = #tpu.pipeline_mode<synchronous>, transform_indices = @transform_10, window_bounds = array<i64: 32, 32>}, {pipeline_mode = #tpu.pipeline_mode<synchronous>, transform_indices = @transform_11, window_bounds = array<i64: 1, 32>}, {pipeline_mode = #tpu.pipeline_mode<synchronous>, transform_indices = @transform_12, window_bounds = array<i64: 1, 32>}, {pipeline_mode = #tpu.pipeline_mode<synchronous>, transform_indices = @transform_13, window_bounds = array<i64: 1, 32>}, {transform_indices = @transform_14, window_bounds = array<i64: 1, 8, 32>}]} {
    %c0_i32 = arith.constant 0 : i32
    %0 = arith.cmpi eq, %arg1, %c0_i32 : i32
    %1 = arith.extui %0 : i1 to i32
    %c0_i32_0 = arith.constant 0 : i32
    %2 = arith.cmpi ne, %1, %c0_i32_0 : i32
    scf.if %2 {
      %c0_53 = arith.constant 0 : index
      %c0_54 = arith.constant 0 : index
      %c0_55 = arith.constant 0 : index
      %123 = vector.load %arg4[%c0_53, %c0_54, %c0_55] : memref<1x16x32xf32, #tpu.memory_space<vmem>>, vector<1x16x32xf32>
      %124 = vector.shape_cast %123 : vector<1x16x32xf32> to vector<16x32xf32>
      %c0_56 = arith.constant 0 : index
      %c0_57 = arith.constant 0 : index
      %c0_58 = arith.constant 0 : index
      %125 = vector.load %arg5[%c0_56, %c0_57, %c0_58] : memref<1x16x32xf32, #tpu.memory_space<vmem>>, vector<1x16x32xf32>
      %126 = vector.shape_cast %125 : vector<1x16x32xf32> to vector<16x32xf32>
      %c0_59 = arith.constant 0 : index
      %c0_60 = arith.constant 0 : index
      %127 = vector.load %arg8[%c0_59, %c0_60] : memref<32x32xf32, #tpu.memory_space<vmem>>, vector<32x32xf32>
      %cst_61 = arith.constant dense<0.000000e+00> : vector<16x32xf32>
      %128 = tpu.matmul %124, %127, %cst_61 {dimension_numbers = #tpu.dot_dimension_numbers<[1], [0], [0], [1], [0, 0, 1, 1], [], []>} : vector<16x32xf32>, vector<32x32xf32>, vector<16x32xf32> -> vector<16x32xf32>
      %c0_62 = arith.constant 0 : index
      %c0_63 = arith.constant 0 : index
      %129 = vector.load %arg9[%c0_62, %c0_63] : memref<1x32xf32, #tpu.memory_space<vmem>>, vector<1x32xf32>
      %130 = vector.broadcast %129 : vector<1x32xf32> to vector<16x32xf32>
      %131 = arith.addf %128, %130 : vector<16x32xf32>
      %c0_64 = arith.constant 0 : index
      %c0_65 = arith.constant 0 : index
      %132 = vector.load %arg10[%c0_64, %c0_65] : memref<32x32xf32, #tpu.memory_space<vmem>>, vector<32x32xf32>
      %cst_66 = arith.constant dense<0.000000e+00> : vector<16x32xf32>
      %133 = tpu.matmul %126, %132, %cst_66 {dimension_numbers = #tpu.dot_dimension_numbers<[1], [0], [0], [1], [0, 0, 1, 1], [], []>} : vector<16x32xf32>, vector<32x32xf32>, vector<16x32xf32> -> vector<16x32xf32>
      %c0_67 = arith.constant 0 : index
      %c0_68 = arith.constant 0 : index
      %134 = vector.load %arg11[%c0_67, %c0_68] : memref<1x32xf32, #tpu.memory_space<vmem>>, vector<1x32xf32>
      %135 = vector.broadcast %134 : vector<1x32xf32> to vector<16x32xf32>
      %136 = arith.addf %133, %135 : vector<16x32xf32>
      %c0_69 = arith.constant 0 : index
      %c0_70 = arith.constant 0 : index
      %137 = vector.load %arg17[%c0_69, %c0_70] : memref<16x32xf32, #tpu.memory_space<vmem>>, vector<16x32xf32>
      tpu.vector_store %arg17[%c0_69, %c0_70], %131 {strides = array<i32>} : memref<16x32xf32, #tpu.memory_space<vmem>>, vector<16x32xf32>,
      %c0_71 = arith.constant 0 : index
      %c0_72 = arith.constant 0 : index
      %138 = vector.load %arg18[%c0_71, %c0_72] : memref<16x32xf32, #tpu.memory_space<vmem>>, vector<16x32xf32>
      tpu.vector_store %arg18[%c0_71, %c0_72], %136 {strides = array<i32>} : memref<16x32xf32, #tpu.memory_space<vmem>>, vector<16x32xf32>,
    } else {
    }
    %c0 = arith.constant 0 : index
    %c0_1 = arith.constant 0 : index
    %c0_2 = arith.constant 0 : index
    %3 = vector.load %arg3[%c0, %c0_1, %c0_2] : memref<1x8x32xf32, #tpu.memory_space<vmem>>, vector<1x8x32xf32>
    %4 = vector.shape_cast %3 : vector<1x8x32xf32> to vector<8x32xf32>
    %c0_3 = arith.constant 0 : index
    %c0_4 = arith.constant 0 : index
    %5 = vector.load %arg6[%c0_3, %c0_4] : memref<32x32xf32, #tpu.memory_space<vmem>>, vector<32x32xf32>
    %cst = arith.constant dense<0.000000e+00> : vector<8x32xf32>
    %6 = tpu.matmul %4, %5, %cst {dimension_numbers = #tpu.dot_dimension_numbers<[1], [0], [0], [1], [0, 0, 1, 1], [], []>} : vector<8x32xf32>, vector<32x32xf32>, vector<8x32xf32> -> vector<8x32xf32>
    %c0_5 = arith.constant 0 : index
    %c0_6 = arith.constant 0 : index
    %7 = vector.load %arg7[%c0_5, %c0_6] : memref<1x32xf32, #tpu.memory_space<vmem>>, vector<1x32xf32>
    %8 = vector.broadcast %7 : vector<1x32xf32> to vector<8x32xf32>
    %9 = arith.addf %6, %8 : vector<8x32xf32>
    %cst_7 = arith.constant 0.353553385 : f32
    %10 = vector.broadcast %cst_7 : f32 to vector<8x32xf32>
    %11 = arith.mulf %9, %10 : vector<8x32xf32>
    %c0_8 = arith.constant 0 : index
    %c0_9 = arith.constant 0 : index
    %12 = vector.load %arg17[%c0_8, %c0_9] : memref<16x32xf32, #tpu.memory_space<vmem>>, vector<16x32xf32>
    %c0_10 = arith.constant 0 : index
    %c0_11 = arith.constant 0 : index
    %13 = vector.load %arg18[%c0_10, %c0_11] : memref<16x32xf32, #tpu.memory_space<vmem>>, vector<16x32xf32>
    %c0_12 = arith.constant 0 : index
    %c0_13 = arith.constant 0 : index
    %14 = vector.load %arg12[%c0_12, %c0_13] : memref<32x32xf32, #tpu.memory_space<vmem>>, vector<32x32xf32>
    %cst_14 = arith.constant 0.000000e+00 : f32
    %15 = vector.broadcast %cst_14 : f32 to vector<8x32xf32>
    %c0_15 = arith.constant 0 : index
    %c0_16 = arith.constant 0 : index
    %16 = vector.load %arg13[%c0_15, %c0_16] : memref<1x32xf32, #tpu.memory_space<vmem>>, vector<1x32xf32>
    %17 = vector.broadcast %16 : vector<1x32xf32> to vector<8x32xf32>
    %18 = arith.addf %15, %17 : vector<8x32xf32>
    %19 = vector.extract_strided_slice %11 {offsets = [0, 0], sizes = [8, 8], strides = [1, 1]} : vector<8x32xf32> to vector<8x8xf32>
    %20 = vector.extract_strided_slice %12 {offsets = [0, 0], sizes = [16, 8], strides = [1, 1]} : vector<16x32xf32> to vector<16x8xf32>
    %21 = vector.extract_strided_slice %13 {offsets = [0, 0], sizes = [16, 8], strides = [1, 1]} : vector<16x32xf32> to vector<16x8xf32>
    %cst_17 = arith.constant dense<0.000000e+00> : vector<8x16xf32>
    %22 = tpu.matmul %19, %20, %cst_17 {dimension_numbers = #tpu.dot_dimension_numbers<[1], [1], [0], [0], [0, 0, 1, 0], [], []>} : vector<8x8xf32>, vector<16x8xf32>, vector<8x16xf32> -> vector<8x16xf32>
    %cst_18 = arith.constant dense<0xFF800000> : vector<8xf32>
    %23 = vector.multi_reduction <maximumf>, %22, %cst_18 [1] : vector<8x16xf32> to vector<8xf32>
    %24 = vector.shape_cast %23 : vector<8xf32> to vector<8x1xf32>
    %25 = vector.broadcast %24 : vector<8x1xf32> to vector<8x16xf32>
    %26 = arith.subf %22, %25 : vector<8x16xf32>
    %27 = math.exp %26 : vector<8x16xf32>
    %cst_19 = arith.constant dense<0.000000e+00> : vector<8xf32>
    %28 = vector.multi_reduction <add>, %27, %cst_19 [1] : vector<8x16xf32> to vector<8xf32>
    %29 = vector.shape_cast %28 : vector<8xf32> to vector<8x1xf32>
    %cst_20 = arith.constant dense<0.000000e+00> : vector<8x8xf32>
    %30 = tpu.matmul %27, %21, %cst_20 {dimension_numbers = #tpu.dot_dimension_numbers<[1], [0], [0], [1], [0, 0, 1, 1], [], []>} : vector<8x16xf32>, vector<16x8xf32>, vector<8x8xf32> -> vector<8x8xf32>
    %31 = tpu.reciprocal %29 : vector<8x1xf32> -> vector<8x1xf32>
    %32 = vector.broadcast %31 : vector<8x1xf32> to vector<8x8xf32>
    %33 = arith.mulf %30, %32 : vector<8x8xf32>
    %34 = vector.extract_strided_slice %14 {offsets = [0, 0], sizes = [8, 32], strides = [1, 1]} : vector<32x32xf32> to vector<8x32xf32>
    %cst_21 = arith.constant dense<0.000000e+00> : vector<8x32xf32>
    %35 = tpu.matmul %33, %34, %cst_21 {dimension_numbers = #tpu.dot_dimension_numbers<[1], [0], [0], [1], [0, 0, 1, 1], [], []>} : vector<8x8xf32>, vector<8x32xf32>, vector<8x32xf32> -> vector<8x32xf32>
    %36 = arith.addf %18, %35 : vector<8x32xf32>
    %37 = vector.extract_strided_slice %11 {offsets = [0, 8], sizes = [8, 8], strides = [1, 1]} : vector<8x32xf32> to vector<8x8xf32>
    %38 = vector.extract_strided_slice %12 {offsets = [0, 8], sizes = [16, 8], strides = [1, 1]} : vector<16x32xf32> to vector<16x8xf32>
    %39 = vector.extract_strided_slice %13 {offsets = [0, 8], sizes = [16, 8], strides = [1, 1]} : vector<16x32xf32> to vector<16x8xf32>
    %cst_22 = arith.constant dense<0.000000e+00> : vector<8x16xf32>
    %40 = tpu.matmul %37, %38, %cst_22 {dimension_numbers = #tpu.dot_dimension_numbers<[1], [1], [0], [0], [0, 0, 1, 0], [], []>} : vector<8x8xf32>, vector<16x8xf32>, vector<8x16xf32> -> vector<8x16xf32>
    %cst_23 = arith.constant dense<0xFF800000> : vector<8xf32>
    %41 = vector.multi_reduction <maximumf>, %40, %cst_23 [1] : vector<8x16xf32> to vector<8xf32>
    %42 = vector.shape_cast %41 : vector<8xf32> to vector<8x1xf32>
    %43 = vector.broadcast %42 : vector<8x1xf32> to vector<8x16xf32>
    %44 = arith.subf %40, %43 : vector<8x16xf32>
    %45 = math.exp %44 : vector<8x16xf32>
    %cst_24 = arith.constant dense<0.000000e+00> : vector<8xf32>
    %46 = vector.multi_reduction <add>, %45, %cst_24 [1] : vector<8x16xf32> to vector<8xf32>
    %47 = vector.shape_cast %46 : vector<8xf32> to vector<8x1xf32>
    %cst_25 = arith.constant dense<0.000000e+00> : vector<8x8xf32>
    %48 = tpu.matmul %45, %39, %cst_25 {dimension_numbers = #tpu.dot_dimension_numbers<[1], [0], [0], [1], [0, 0, 1, 1], [], []>} : vector<8x16xf32>, vector<16x8xf32>, vector<8x8xf32> -> vector<8x8xf32>
    %49 = tpu.reciprocal %47 : vector<8x1xf32> -> vector<8x1xf32>
    %50 = vector.broadcast %49 : vector<8x1xf32> to vector<8x8xf32>
    %51 = arith.mulf %48, %50 : vector<8x8xf32>
    %52 = vector.extract_strided_slice %14 {offsets = [8, 0], sizes = [8, 32], strides = [1, 1]} : vector<32x32xf32> to vector<8x32xf32>
    %cst_26 = arith.constant dense<0.000000e+00> : vector<8x32xf32>
    %53 = tpu.matmul %51, %52, %cst_26 {dimension_numbers = #tpu.dot_dimension_numbers<[1], [0], [0], [1], [0, 0, 1, 1], [], []>} : vector<8x8xf32>, vector<8x32xf32>, vector<8x32xf32> -> vector<8x32xf32>
    %54 = arith.addf %36, %53 : vector<8x32xf32>
    %55 = vector.extract_strided_slice %11 {offsets = [0, 16], sizes = [8, 8], strides = [1, 1]} : vector<8x32xf32> to vector<8x8xf32>
    %56 = vector.extract_strided_slice %12 {offsets = [0, 16], sizes = [16, 8], strides = [1, 1]} : vector<16x32xf32> to vector<16x8xf32>
    %57 = vector.extract_strided_slice %13 {offsets = [0, 16], sizes = [16, 8], strides = [1, 1]} : vector<16x32xf32> to vector<16x8xf32>
    %cst_27 = arith.constant dense<0.000000e+00> : vector<8x16xf32>
    %58 = tpu.matmul %55, %56, %cst_27 {dimension_numbers = #tpu.dot_dimension_numbers<[1], [1], [0], [0], [0, 0, 1, 0], [], []>} : vector<8x8xf32>, vector<16x8xf32>, vector<8x16xf32> -> vector<8x16xf32>
    %cst_28 = arith.constant dense<0xFF800000> : vector<8xf32>
    %59 = vector.multi_reduction <maximumf>, %58, %cst_28 [1] : vector<8x16xf32> to vector<8xf32>
    %60 = vector.shape_cast %59 : vector<8xf32> to vector<8x1xf32>
    %61 = vector.broadcast %60 : vector<8x1xf32> to vector<8x16xf32>
    %62 = arith.subf %58, %61 : vector<8x16xf32>
    %63 = math.exp %62 : vector<8x16xf32>
    %cst_29 = arith.constant dense<0.000000e+00> : vector<8xf32>
    %64 = vector.multi_reduction <add>, %63, %cst_29 [1] : vector<8x16xf32> to vector<8xf32>
    %65 = vector.shape_cast %64 : vector<8xf32> to vector<8x1xf32>
    %cst_30 = arith.constant dense<0.000000e+00> : vector<8x8xf32>
    %66 = tpu.matmul %63, %57, %cst_30 {dimension_numbers = #tpu.dot_dimension_numbers<[1], [0], [0], [1], [0, 0, 1, 1], [], []>} : vector<8x16xf32>, vector<16x8xf32>, vector<8x8xf32> -> vector<8x8xf32>
    %67 = tpu.reciprocal %65 : vector<8x1xf32> -> vector<8x1xf32>
    %68 = vector.broadcast %67 : vector<8x1xf32> to vector<8x8xf32>
    %69 = arith.mulf %66, %68 : vector<8x8xf32>
    %70 = vector.extract_strided_slice %14 {offsets = [16, 0], sizes = [8, 32], strides = [1, 1]} : vector<32x32xf32> to vector<8x32xf32>
    %cst_31 = arith.constant dense<0.000000e+00> : vector<8x32xf32>
    %71 = tpu.matmul %69, %70, %cst_31 {dimension_numbers = #tpu.dot_dimension_numbers<[1], [0], [0], [1], [0, 0, 1, 1], [], []>} : vector<8x8xf32>, vector<8x32xf32>, vector<8x32xf32> -> vector<8x32xf32>
    %72 = arith.addf %54, %71 : vector<8x32xf32>
    %73 = vector.extract_strided_slice %11 {offsets = [0, 24], sizes = [8, 8], strides = [1, 1]} : vector<8x32xf32> to vector<8x8xf32>
    %74 = vector.extract_strided_slice %12 {offsets = [0, 24], sizes = [16, 8], strides = [1, 1]} : vector<16x32xf32> to vector<16x8xf32>
    %75 = vector.extract_strided_slice %13 {offsets = [0, 24], sizes = [16, 8], strides = [1, 1]} : vector<16x32xf32> to vector<16x8xf32>
    %cst_32 = arith.constant dense<0.000000e+00> : vector<8x16xf32>
    %76 = tpu.matmul %73, %74, %cst_32 {dimension_numbers = #tpu.dot_dimension_numbers<[1], [1], [0], [0], [0, 0, 1, 0], [], []>} : vector<8x8xf32>, vector<16x8xf32>, vector<8x16xf32> -> vector<8x16xf32>
    %cst_33 = arith.constant dense<0xFF800000> : vector<8xf32>
    %77 = vector.multi_reduction <maximumf>, %76, %cst_33 [1] : vector<8x16xf32> to vector<8xf32>
    %78 = vector.shape_cast %77 : vector<8xf32> to vector<8x1xf32>
    %79 = vector.broadcast %78 : vector<8x1xf32> to vector<8x16xf32>
    %80 = arith.subf %76, %79 : vector<8x16xf32>
    %81 = math.exp %80 : vector<8x16xf32>
    %cst_34 = arith.constant dense<0.000000e+00> : vector<8xf32>
    %82 = vector.multi_reduction <add>, %81, %cst_34 [1] : vector<8x16xf32> to vector<8xf32>
    %83 = vector.shape_cast %82 : vector<8xf32> to vector<8x1xf32>
    %cst_35 = arith.constant dense<0.000000e+00> : vector<8x8xf32>
    %84 = tpu.matmul %81, %75, %cst_35 {dimension_numbers = #tpu.dot_dimension_numbers<[1], [0], [0], [1], [0, 0, 1, 1], [], []>} : vector<8x16xf32>, vector<16x8xf32>, vector<8x8xf32> -> vector<8x8xf32>
    %85 = tpu.reciprocal %83 : vector<8x1xf32> -> vector<8x1xf32>
    %86 = vector.broadcast %85 : vector<8x1xf32> to vector<8x8xf32>
    %87 = arith.mulf %84, %86 : vector<8x8xf32>
    %88 = vector.extract_strided_slice %14 {offsets = [24, 0], sizes = [8, 32], strides = [1, 1]} : vector<32x32xf32> to vector<8x32xf32>
    %cst_36 = arith.constant dense<0.000000e+00> : vector<8x32xf32>
    %89 = tpu.matmul %87, %88, %cst_36 {dimension_numbers = #tpu.dot_dimension_numbers<[1], [0], [0], [1], [0, 0, 1, 1], [], []>} : vector<8x8xf32>, vector<8x32xf32>, vector<8x32xf32> -> vector<8x32xf32>
    %90 = arith.addf %72, %89 : vector<8x32xf32>
    %c0_37 = arith.constant 0 : index
    %c0_38 = arith.constant 0 : index
    %c0_39 = arith.constant 0 : index
    %91 = vector.load %arg2[%c0_37, %c0_38, %c0_39] : memref<1x8x32xf32, #tpu.memory_space<vmem>>, vector<1x8x32xf32>
    %92 = vector.shape_cast %91 : vector<1x8x32xf32> to vector<8x32xf32>
    %93 = arith.addf %92, %90 : vector<8x32xf32>
    %cst_40 = arith.constant dense<0.000000e+00> : vector<8xf32>
    %94 = vector.multi_reduction <add>, %93, %cst_40 [1] : vector<8x32xf32> to vector<8xf32>
    %95 = vector.shape_cast %94 : vector<8xf32> to vector<8x1xf32>
    %96 = arith.mulf %93, %93 : vector<8x32xf32>
    %cst_41 = arith.constant dense<0.000000e+00> : vector<8xf32>
    %97 = vector.multi_reduction <add>, %96, %cst_41 [1] : vector<8x32xf32> to vector<8xf32>
    %98 = vector.shape_cast %97 : vector<8xf32> to vector<8x1xf32>
    %cst_42 = arith.constant 3.125000e-02 : f32
    %99 = vector.broadcast %cst_42 : f32 to vector<8x1xf32>
    %100 = arith.mulf %95, %99 : vector<8x1xf32>
    %cst_43 = arith.constant 3.125000e-02 : f32
    %101 = vector.broadcast %cst_43 : f32 to vector<8x1xf32>
    %102 = arith.mulf %98, %101 : vector<8x1xf32>
    %103 = arith.mulf %100, %100 : vector<8x1xf32>
    %104 = arith.subf %102, %103 : vector<8x1xf32>
    %cst_44 = arith.constant 0.000000e+00 : f32
    %105 = vector.broadcast %cst_44 : f32 to vector<8x1xf32>
    %106 = arith.maximumf %104, %105 : vector<8x1xf32>
    %107 = vector.broadcast %100 : vector<8x1xf32> to vector<8x32xf32>
    %108 = arith.subf %93, %107 : vector<8x32xf32>
    %cst_45 = arith.constant 9.99999974E-6 : f32
    %109 = vector.broadcast %cst_45 : f32 to vector<8x1xf32>
    %110 = arith.addf %106, %109 : vector<8x1xf32>
    %111 = math.rsqrt %110 : vector<8x1xf32>
    %112 = vector.broadcast %111 : vector<8x1xf32> to vector<8x32xf32>
    %113 = arith.mulf %108, %112 : vector<8x32xf32>
    %c0_46 = arith.constant 0 : index
    %c0_47 = arith.constant 0 : index
    %114 = vector.load %arg14[%c0_46, %c0_47] : memref<1x32xf32, #tpu.memory_space<vmem>>, vector<1x32xf32>
    %115 = vector.broadcast %114 : vector<1x32xf32> to vector<8x32xf32>
    %116 = arith.mulf %113, %115 : vector<8x32xf32>
    %c0_48 = arith.constant 0 : index
    %c0_49 = arith.constant 0 : index
    %117 = vector.load %arg15[%c0_48, %c0_49] : memref<1x32xf32, #tpu.memory_space<vmem>>, vector<1x32xf32>
    %118 = vector.broadcast %117 : vector<1x32xf32> to vector<8x32xf32>
    %119 = arith.addf %116, %118 : vector<8x32xf32>
    %c0_50 = arith.constant 0 : index
    %c0_51 = arith.constant 0 : index
    %c0_52 = arith.constant 0 : index
    %120 = vector.load %arg16[%c0_50, %c0_51, %c0_52] : memref<1x8x32xf32, #tpu.memory_space<vmem>>, vector<1x8x32xf32>
    %121 = vector.shape_cast %120 : vector<1x8x32xf32> to vector<8x32xf32>
    %122 = vector.shape_cast %119 : vector<8x32xf32> to vector<1x8x32xf32>
    tpu.vector_store %arg16[%c0_50, %c0_51, %c0_52], %122 {strides = array<i32>} : memref<1x8x32xf32, #tpu.memory_space<vmem>>, vector<1x8x32xf32>,
    return
  }
  func.func @transform_0(%arg0: i32, %arg1: i32) -> (i32, i32, i32) {
    %c0_i32 = arith.constant 0 : i32
    %c0_i32_0 = arith.constant 0 : i32
    return %arg0, %arg1, %c0_i32 : i32, i32, i32
  }
  func.func @transform_1(%arg0: i32, %arg1: i32) -> (i32, i32, i32) {
    %c0_i32 = arith.constant 0 : i32
    %c0_i32_0 = arith.constant 0 : i32
    return %arg0, %arg1, %c0_i32 : i32, i32, i32
  }
  func.func @transform_2(%arg0: i32, %arg1: i32) -> (i32, i32, i32) {
    %c0_i32 = arith.constant 0 : i32
    %c0_i32_0 = arith.constant 0 : i32
    %c0_i32_1 = arith.constant 0 : i32
    return %arg0, %c0_i32, %c0_i32_0 : i32, i32, i32
  }
  func.func @transform_3(%arg0: i32, %arg1: i32) -> (i32, i32, i32) {
    %c0_i32 = arith.constant 0 : i32
    %c0_i32_0 = arith.constant 0 : i32
    %c0_i32_1 = arith.constant 0 : i32
    return %arg0, %c0_i32, %c0_i32_0 : i32, i32, i32
  }
  func.func @transform_4(%arg0: i32, %arg1: i32) -> (i32, i32) {
    %c0_i32 = arith.constant 0 : i32
    %c0_i32_0 = arith.constant 0 : i32
    %c0_i32_1 = arith.constant 0 : i32
    return %c0_i32, %c0_i32_0 : i32, i32
  }
  func.func @transform_5(%arg0: i32, %arg1: i32) -> (i32, i32) {
    %c0_i32 = arith.constant 0 : i32
    %c0_i32_0 = arith.constant 0 : i32
    %c0_i32_1 = arith.constant 0 : i32
    return %c0_i32, %c0_i32_0 : i32, i32
  }
  func.func @transform_6(%arg0: i32, %arg1: i32) -> (i32, i32) {
    %c0_i32 = arith.constant 0 : i32
    %c0_i32_0 = arith.constant 0 : i32
    %c0_i32_1 = arith.constant 0 : i32
    return %c0_i32, %c0_i32_0 : i32, i32
  }
  func.func @transform_7(%arg0: i32, %arg1: i32) -> (i32, i32) {
    %c0_i32 = arith.constant 0 : i32
    %c0_i32_0 = arith.constant 0 : i32
    %c0_i32_1 = arith.constant 0 : i32
    return %c0_i32, %c0_i32_0 : i32, i32
  }
  func.func @transform_8(%arg0: i32, %arg1: i32) -> (i32, i32) {
    %c0_i32 = arith.constant 0 : i32
    %c0_i32_0 = arith.constant 0 : i32
    %c0_i32_1 = arith.constant 0 : i32
    return %c0_i32, %c0_i32_0 : i32, i32
  }
  func.func @transform_9(%arg0: i32, %arg1: i32) -> (i32, i32) {
    %c0_i32 = arith.constant 0 : i32
    %c0_i32_0 = arith.constant 0 : i32
    %c0_i32_1 = arith.constant 0 : i32
    return %c0_i32, %c0_i32_0 : i32, i32
  }
  func.func @transform_10(%arg0: i32, %arg1: i32) -> (i32, i32) {
    %c0_i32 = arith.constant 0 : i32
    %c0_i32_0 = arith.constant 0 : i32
    %c0_i32_1 = arith.constant 0 : i32
    return %c0_i32, %c0_i32_0 : i32, i32
  }
  func.func @transform_11(%arg0: i32, %arg1: i32) -> (i32, i32) {
    %c0_i32 = arith.constant 0 : i32
    %c0_i32_0 = arith.constant 0 : i32
    %c0_i32_1 = arith.constant 0 : i32
    return %c0_i32, %c0_i32_0 : i32, i32
  }
  func.func @transform_12(%arg0: i32, %arg1: i32) -> (i32, i32) {
    %c0_i32 = arith.constant 0 : i32
    %c0_i32_0 = arith.constant 0 : i32
    %c0_i32_1 = arith.constant 0 : i32
    return %c0_i32, %c0_i32_0 : i32, i32
  }
  func.func @transform_13(%arg0: i32, %arg1: i32) -> (i32, i32) {
    %c0_i32 = arith.constant 0 : i32
    %c0_i32_0 = arith.constant 0 : i32
    %c0_i32_1 = arith.constant 0 : i32
    return %c0_i32, %c0_i32_0 : i32, i32
  }
  func.func @transform_14(%arg0: i32, %arg1: i32) -> (i32, i32, i32) {
    %c0_i32 = arith.constant 0 : i32
    %c0_i32_0 = arith.constant 0 : i32
    return %arg0, %arg1, %c0_i32 : i32, i32, i32
  }
}

</mosaic_0001>

<llo_original>
// kernel: tpu_custom_call.1
$region0: #{tpu_custom_call.1}
  #allocation0 [shape = 'u32[]', space=smem, size = 0x4, offset = 0x4, fixed_abs, tag = 'smem constant byte address 0x4 - core index']
  #allocation1 [shape = 'u32[144,128]{1,0:T(1,128)}', space=vmem, size = 0x12000, scoped, tag = 'internal scratch']
  #allocation2 [shape = 'f32[16,32]{1,0:T(8,128)}', space=vmem, size = 0x2000, scoped, tag = 'scratch operand']
  #allocation3 [shape = 'f32[16,32]{1,0:T(8,128)}', space=vmem, size = 0x2000, scoped, tag = 'scratch operand']
  %s0 = inlined_call_operand.hbm [shape: f32[2,8,32], index: 0, kind: input, shape index: {}]
  %s1 = inlined_call_operand.hbm [shape: f32[2,8,32], index: 1, kind: input, shape index: {}]
  %s2 = inlined_call_operand.hbm [shape: f32[2,16,32], index: 2, kind: input, shape index: {}]
  %s3 = inlined_call_operand.hbm [shape: f32[2,16,32], index: 3, kind: input, shape index: {}]
  %s4 = inlined_call_operand.hbm [shape: f32[32,32], index: 4, kind: input, shape index: {}]
  %s5 = inlined_call_operand.vmem [shape: f32[1,32], index: 5, kind: input, shape index: {}]
  %s6 = inlined_call_operand.hbm [shape: f32[32,32], index: 6, kind: input, shape index: {}]
  %s7 = inlined_call_operand.vmem [shape: f32[1,32], index: 7, kind: input, shape index: {}]
  %s8 = inlined_call_operand.hbm [shape: f32[32,32], index: 8, kind: input, shape index: {}]
  %s9 = inlined_call_operand.vmem [shape: f32[1,32], index: 9, kind: input, shape index: {}]
  %s10 = inlined_call_operand.vmem [shape: f32[32,32], index: 10, kind: input, shape index: {}]
  %s11 = inlined_call_operand.vmem [shape: f32[1,32], index: 11, kind: input, shape index: {}]
  %s12 = inlined_call_operand.vmem [shape: f32[1,32], index: 12, kind: input, shape index: {}]
  %s13 = inlined_call_operand.vmem [shape: f32[1,32], index: 13, kind: input, shape index: {}]
  %s14 = inlined_call_operand.hbm [shape: f32[2,8,32], index: 14, kind: output, shape index: {}]
  %s15 = sld [smem:[#allocation0]]
  $region121: #{tpu_custom_call.1} parent=0
    _
  %s17 = ssub.s32 1, %s15
  %s18 = scalar_select 0, %s17, %s15
  $region1: #{tpu_custom_call.1} parent=0
    #allocation4 [shape = 'u8[8192]{0}', space=vmem, size = 0x2000, scoped, tag = 'input window, operand 0']
    #allocation5 [shape = 's32[2]{0}', space=sflag, size = 0x8, scoped, tag = 'scoped memory for tpu_custom_call.1']
    #allocation6 [shape = 's32[2]{0}', space=sflag, size = 0x8, scoped, tag = 'scoped memory for tpu_custom_call.1']
    #allocation7 [shape = 'u8[8192]{0}', space=vmem, size = 0x2000, scoped, tag = 'input window, operand 1']
    #allocation8 [shape = 's32[2]{0}', space=sflag, size = 0x8, scoped, tag = 'scoped memory for tpu_custom_call.1']
    #allocation9 [shape = 'u8[16384]{0}', space=vmem, size = 0x4000, scoped, tag = 'input window, operand 2']
    #allocation10 [shape = 'u8[16384]{0}', space=vmem, size = 0x4000, scoped, tag = 'input window, operand 3']
    #allocation11 [shape = 's32[2]{0}', space=sflag, size = 0x8, scoped, tag = 'scoped memory for tpu_custom_call.1']
    #allocation12 [shape = 'u8[16384]{0}', space=vmem, size = 0x4000, scoped, tag = 'input window, operand 4, single buffered']
    #allocation13 [shape = 'u8[16384]{0}', space=vmem, size = 0x4000, scoped, tag = 'input window, operand 6, single buffered']
    #allocation14 [shape = 's32[1]{0}', space=sflag, size = 0x4, scoped, tag = 'scoped memory for tpu_custom_call.1']
    #allocation15 [shape = 'u8[16384]{0}', space=vmem, size = 0x4000, scoped, tag = 'input window, operand 8, single buffered']
    #allocation16 [shape = 'u8[8192]{0}', space=vmem, size = 0x2000, scoped, tag = 'output window, operand 0']
    %19 = vsyncpa [#allocation5], 0
    %s20 = scalar_lea.sflag [#allocation5], 1
    %21 = vsyncpa %s20, 0
    %22 = vsyncpa [#allocation8], 0
    %s23 = scalar_lea.sflag [#allocation8], 1
    %24 = vsyncpa %s23, 0
    %25 = vsyncpa [#allocation11], 0
    %s26 = scalar_lea.sflag [#allocation11], 1
    %27 = vsyncpa %s26, 0
    %28 = vsyncpa [#allocation14], 0
    %29 = vsyncpa [#allocation6], 0
    %s30 = scalar_lea.sflag [#allocation6], 1
    %31 = vsyncpa %s30, 0
    loop: start=0, step=1, limit=4
    $region2: #{tpu_custom_call.1} parent=1 // loop_pre_header
      _
    $region3: #{tpu_custom_call.1} parent=1 // loop_header
      %s33 = sphi 0, %s37
      %p34 = scmp.ge.s32.totalorder %s33, 4
      %s40 = sphi 0, %s52
      %s41 = sphi 0, %s48
      %s42 = sphi 0, %s40
      %s43 = sphi 0, %s41
      %s44 = sphi 0, %s42
      %s45 = sphi 0, %s43
      %s57 = sphi 0, %s59
      %s60 = sphi 0, %s57
      %s61 = sphi 0, %s60
      %s77 = sphi 0, %s61
      %s85 = sphi 0, %s87
      %s88 = sphi 0, %s85
      %s89 = sphi 0, %s88
      %s105 = sphi 0, %s89
      %s111 = sphi 0, %s113
      %s114 = sphi 0, %s111
      %s115 = sphi 0, %s114
      %s131 = sphi 0, %s115
      %s137 = sphi 0, %s139
      %s140 = sphi 0, %s137
      %s141 = sphi 0, %s140
      %s157 = sphi 0, %s141
      %s161 = sphi 0, %s161
      %s163 = sphi 0, %s161
      %s164 = sphi 0, %s163
      %s178 = sphi 0, %s164
      %s182 = sphi 0, %s182
      %s184 = sphi 0, %s182
      %s185 = sphi 0, %s184
      %s199 = sphi 0, %s185
      %s203 = sphi 0, %s203
      %s205 = sphi 0, %s203
      %s206 = sphi 0, %s205
      %s220 = sphi 0, %s206
      %s224 = sphi 0, %s224
      %s226 = sphi 0, %s224
      %s227 = sphi 0, %s226
      %s241 = sphi 0, %s227
      %s245 = sphi 0, %s245
      %s247 = sphi 0, %s245
      %s248 = sphi 0, %s247
      %s262 = sphi 0, %s248
      %s266 = sphi 0, %s266
      %s268 = sphi 0, %s266
      %s269 = sphi 0, %s268
      %s283 = sphi 0, %s269
      %s287 = sphi 0, %s287
      %s289 = sphi 0, %s287
      %s290 = sphi 0, %s289
      %s304 = sphi 0, %s290
      %s308 = sphi 0, %s308
      %s310 = sphi 0, %s308
      %s311 = sphi 0, %s310
      %s325 = sphi 0, %s311
      %s329 = sphi 0, %s329
      %s331 = sphi 0, %s329
      %s332 = sphi 0, %s331
      %s346 = sphi 0, %s332
      %s350 = sphi 0, %s350
      %s352 = sphi 0, %s350
      %s353 = sphi 0, %s352
      %s367 = sphi 0, %s353
      %s375 = sphi 0, %s377
      %s378 = sphi 0, %s375
      %s379 = sphi 0, %s378
      %s395 = sphi 0, %s379
    $region4: #{tpu_custom_call.1} parent=1 // loop_header_branch
      %36 = sbr.rel (%p34) target = $region8
    $region5: #{tpu_custom_call.1} parent=1 // loop_body
      %s38 = ssub.s32 %s33, 1
      %s39 = ssub.s32 %s33, 2
      %s46 = sadd.s32 1, %s41
      %p47 = scmp.ge.s32.totalorder %s46, 1
      %s48 = scalar_select %p47, 0, %s46
      %s49 = sadd.s32 1, %s40
      %s50 = scalar_select %p47, %s49, %s40
      %p51 = scmp.ge.s32.totalorder %s50, 2
      %s52 = scalar_select %p51, 0, %s50
      %s53 = ssub.s32 %s40, %s52
      %s54 = ssub.s32 %s41, %s48
      %s55 = sor.u32 %s53, %s54
      %p56 = scmp.eq.s32.totalorder %s55, 0
      %s58 = sadd.s32 %s57, 1
      %s59 = scalar_select %p56, %s57, %s58
      %p62 = pneg %p56
      %p63 = scmp.eq.s32.totalorder %s33, 1
      %p64 = por %p62, %p63
      %p65 = scmp.ne.s32.totalorder %s57, %s60
      %p66 = scmp.eq.s32.totalorder %s33, 0
      %p67 = por %p65, %p66
      %p68 = scmp.ne.s32.totalorder %s57, %s60
      %p69 = scmp.eq.s32.totalorder %s38, 1
      %p70 = por %p68, %p69
      %p71 = scmp.ne.s32.totalorder %s60, %s61
      %p72 = scmp.eq.s32.totalorder %s38, 0
      %p73 = por %p71, %p72
      %p74 = scmp.ne.s32.totalorder %s60, %s61
      %p75 = scmp.eq.s32.totalorder %s39, 1
      %p76 = por %p74, %p75
      %p78 = scmp.ne.s32.totalorder %s61, %s77
      %p79 = scmp.eq.s32.totalorder %s39, 0
      %p80 = por %p78, %p79
      %s81 = ssub.s32 %s40, %s52
      %s82 = ssub.s32 %s41, %s48
      %s83 = sor.u32 %s81, %s82
      %p84 = scmp.eq.s32.totalorder %s83, 0
      %s86 = sadd.s32 %s85, 1
      %s87 = scalar_select %p84, %s85, %s86
      %p90 = pneg %p84
      %p91 = scmp.eq.s32.totalorder %s33, 1
      %p92 = por %p90, %p91
      %p93 = scmp.ne.s32.totalorder %s85, %s88
      %p94 = scmp.eq.s32.totalorder %s33, 0
      %p95 = por %p93, %p94
      %p96 = scmp.ne.s32.totalorder %s85, %s88
      %p97 = scmp.eq.s32.totalorder %s38, 1
      %p98 = por %p96, %p97
      %p99 = scmp.ne.s32.totalorder %s88, %s89
      %p100 = scmp.eq.s32.totalorder %s38, 0
      %p101 = por %p99, %p100
      %p102 = scmp.ne.s32.totalorder %s88, %s89
      %p103 = scmp.eq.s32.totalorder %s39, 1
      %p104 = por %p102, %p103
      %p106 = scmp.ne.s32.totalorder %s89, %s105
      %p107 = scmp.eq.s32.totalorder %s39, 0
      %p108 = por %p106, %p107
      %s109 = ssub.s32 %s40, %s52
      %p110 = scmp.eq.s32.totalorder %s109, 0
      %s112 = sadd.s32 %s111, 1
      %s113 = scalar_select %p110, %s111, %s112
      %p116 = pneg %p110
      %p117 = scmp.eq.s32.totalorder %s33, 1
      %p118 = por %p116, %p117
      %p119 = scmp.ne.s32.totalorder %s111, %s114
      %p120 = scmp.eq.s32.totalorder %s33, 0
      %p121 = por %p119, %p120
      %p122 = scmp.ne.s32.totalorder %s111, %s114
      %p123 = scmp.eq.s32.totalorder %s38, 1
      %p124 = por %p122, %p123
      %p125 = scmp.ne.s32.totalorder %s114, %s115
      %p126 = scmp.eq.s32.totalorder %s38, 0
      %p127 = por %p125, %p126
      %p128 = scmp.ne.s32.totalorder %s114, %s115
      %p129 = scmp.eq.s32.totalorder %s39, 1
      %p130 = por %p128, %p129
      %p132 = scmp.ne.s32.totalorder %s115, %s131
      %p133 = scmp.eq.s32.totalorder %s39, 0
      %p134 = por %p132, %p133
      %s135 = ssub.s32 %s40, %s52
      %p136 = scmp.eq.s32.totalorder %s135, 0
      %s138 = sadd.s32 %s137, 1
      %s139 = scalar_select %p136, %s137, %s138
      %p142 = pneg %p136
      %p143 = scmp.eq.s32.totalorder %s33, 1
      %p144 = por %p142, %p143
      %p145 = scmp.ne.s32.totalorder %s137, %s140
      %p146 = scmp.eq.s32.totalorder %s33, 0
      %p147 = por %p145, %p146
      %p148 = scmp.ne.s32.totalorder %s137, %s140
      %p149 = scmp.eq.s32.totalorder %s38, 1
      %p150 = por %p148, %p149
      %p151 = scmp.ne.s32.totalorder %s140, %s141
      %p152 = scmp.eq.s32.totalorder %s38, 0
      %p153 = por %p151, %p152
      %p154 = scmp.ne.s32.totalorder %s140, %s141
      %p155 = scmp.eq.s32.totalorder %s39, 1
      %p156 = por %p154, %p155
      %p158 = scmp.ne.s32.totalorder %s141, %s157
      %p159 = scmp.eq.s32.totalorder %s39, 0
      %p160 = por %p158, %p159
      %s162 = sadd.s32 %s161, 1
      %p165 = scmp.eq.s32.totalorder %s33, 1
      %p166 = scmp.ne.s32.totalorder %s161, %s163
      %p167 = scmp.eq.s32.totalorder %s33, 0
      %p168 = por %p166, %p167
      %p169 = scmp.ne.s32.totalorder %s161, %s163
      %p170 = scmp.eq.s32.totalorder %s38, 1
      %p171 = por %p169, %p170
      %p172 = scmp.ne.s32.totalorder %s163, %s164
      %p173 = scmp.eq.s32.totalorder %s38, 0
      %p174 = por %p172, %p173
      %p175 = scmp.ne.s32.totalorder %s163, %s164
      %p176 = scmp.eq.s32.totalorder %s39, 1
      %p177 = por %p175, %p176
      %p179 = scmp.ne.s32.totalorder %s164, %s178
      %p180 = scmp.eq.s32.totalorder %s39, 0
      %p181 = por %p179, %p180
      %s183 = sadd.s32 %s182, 1
      %p186 = scmp.eq.s32.totalorder %s33, 1
      %p187 = scmp.ne.s32.totalorder %s182, %s184
      %p188 = scmp.eq.s32.totalorder %s33, 0
      %p189 = por %p187, %p188
      %p190 = scmp.ne.s32.totalorder %s182, %s184
      %p191 = scmp.eq.s32.totalorder %s38, 1
      %p192 = por %p190, %p191
      %p193 = scmp.ne.s32.totalorder %s184, %s185
      %p194 = scmp.eq.s32.totalorder %s38, 0
      %p195 = por %p193, %p194
      %p196 = scmp.ne.s32.totalorder %s184, %s185
      %p197 = scmp.eq.s32.totalorder %s39, 1
      %p198 = por %p196, %p197
      %p200 = scmp.ne.s32.totalorder %s185, %s199
      %p201 = scmp.eq.s32.totalorder %s39, 0
      %p202 = por %p200, %p201
      %s204 = sadd.s32 %s203, 1
      %p207 = scmp.eq.s32.totalorder %s33, 1
      %p208 = scmp.ne.s32.totalorder %s203, %s205
      %p209 = scmp.eq.s32.totalorder %s33, 0
      %p210 = por %p208, %p209
      %p211 = scmp.ne.s32.totalorder %s203, %s205
      %p212 = scmp.eq.s32.totalorder %s38, 1
      %p213 = por %p211, %p212
      %p214 = scmp.ne.s32.totalorder %s205, %s206
      %p215 = scmp.eq.s32.totalorder %s38, 0
      %p216 = por %p214, %p215
      %p217 = scmp.ne.s32.totalorder %s205, %s206
      %p218 = scmp.eq.s32.totalorder %s39, 1
      %p219 = por %p217, %p218
      %p221 = scmp.ne.s32.totalorder %s206, %s220
      %p222 = scmp.eq.s32.totalorder %s39, 0
      %p223 = por %p221, %p222
      %s225 = sadd.s32 %s224, 1
      %p228 = scmp.eq.s32.totalorder %s33, 1
      %p229 = scmp.ne.s32.totalorder %s224, %s226
      %p230 = scmp.eq.s32.totalorder %s33, 0
      %p231 = por %p229, %p230
      %p232 = scmp.ne.s32.totalorder %s224, %s226
      %p233 = scmp.eq.s32.totalorder %s38, 1
      %p234 = por %p232, %p233
      %p235 = scmp.ne.s32.totalorder %s226, %s227
      %p236 = scmp.eq.s32.totalorder %s38, 0
      %p237 = por %p235, %p236
      %p238 = scmp.ne.s32.totalorder %s226, %s227
      %p239 = scmp.eq.s32.totalorder %s39, 1
      %p240 = por %p238, %p239
      %p242 = scmp.ne.s32.totalorder %s227, %s241
      %p243 = scmp.eq.s32.totalorder %s39, 0
      %p244 = por %p242, %p243
      %s246 = sadd.s32 %s245, 1
      %p249 = scmp.eq.s32.totalorder %s33, 1
      %p250 = scmp.ne.s32.totalorder %s245, %s247
      %p251 = scmp.eq.s32.totalorder %s33, 0
      %p252 = por %p250, %p251
      %p253 = scmp.ne.s32.totalorder %s245, %s247
      %p254 = scmp.eq.s32.totalorder %s38, 1
      %p255 = por %p253, %p254
      %p256 = scmp.ne.s32.totalorder %s247, %s248
      %p257 = scmp.eq.s32.totalorder %s38, 0
      %p258 = por %p256, %p257
      %p259 = scmp.ne.s32.totalorder %s247, %s248
      %p260 = scmp.eq.s32.totalorder %s39, 1
      %p261 = por %p259, %p260
      %p263 = scmp.ne.s32.totalorder %s248, %s262
      %p264 = scmp.eq.s32.totalorder %s39, 0
      %p265 = por %p263, %p264
      %s267 = sadd.s32 %s266, 1
      %p270 = scmp.eq.s32.totalorder %s33, 1
      %p271 = scmp.ne.s32.totalorder %s266, %s268
      %p272 = scmp.eq.s32.totalorder %s33, 0
      %p273 = por %p271, %p272
      %p274 = scmp.ne.s32.totalorder %s266, %s268
      %p275 = scmp.eq.s32.totalorder %s38, 1
      %p276 = por %p274, %p275
      %p277 = scmp.ne.s32.totalorder %s268, %s269
      %p278 = scmp.eq.s32.totalorder %s38, 0
      %p279 = por %p277, %p278
      %p280 = scmp.ne.s32.totalorder %s268, %s269
      %p281 = scmp.eq.s32.totalorder %s39, 1
      %p282 = por %p280, %p281
      %p284 = scmp.ne.s32.totalorder %s269, %s283
      %p285 = scmp.eq.s32.totalorder %s39, 0
      %p286 = por %p284, %p285
      %s288 = sadd.s32 %s287, 1
      %p291 = scmp.eq.s32.totalorder %s33, 1
      %p292 = scmp.ne.s32.totalorder %s287, %s289
      %p293 = scmp.eq.s32.totalorder %s33, 0
      %p294 = por %p292, %p293
      %p295 = scmp.ne.s32.totalorder %s287, %s289
      %p296 = scmp.eq.s32.totalorder %s38, 1
      %p297 = por %p295, %p296
      %p298 = scmp.ne.s32.totalorder %s289, %s290
      %p299 = scmp.eq.s32.totalorder %s38, 0
      %p300 = por %p298, %p299
      %p301 = scmp.ne.s32.totalorder %s289, %s290
      %p302 = scmp.eq.s32.totalorder %s39, 1
      %p303 = por %p301, %p302
      %p305 = scmp.ne.s32.totalorder %s290, %s304
      %p306 = scmp.eq.s32.totalorder %s39, 0
      %p307 = por %p305, %p306
      %s309 = sadd.s32 %s308, 1
      %p312 = scmp.eq.s32.totalorder %s33, 1
      %p313 = scmp.ne.s32.totalorder %s308, %s310
      %p314 = scmp.eq.s32.totalorder %s33, 0
      %p315 = por %p313, %p314
      %p316 = scmp.ne.s32.totalorder %s308, %s310
      %p317 = scmp.eq.s32.totalorder %s38, 1
      %p318 = por %p316, %p317
      %p319 = scmp.ne.s32.totalorder %s310, %s311
      %p320 = scmp.eq.s32.totalorder %s38, 0
      %p321 = por %p319, %p320
      %p322 = scmp.ne.s32.totalorder %s310, %s311
      %p323 = scmp.eq.s32.totalorder %s39, 1
      %p324 = por %p322, %p323
      %p326 = scmp.ne.s32.totalorder %s311, %s325
      %p327 = scmp.eq.s32.totalorder %s39, 0
      %p328 = por %p326, %p327
      %s330 = sadd.s32 %s329, 1
      %p333 = scmp.eq.s32.totalorder %s33, 1
      %p334 = scmp.ne.s32.totalorder %s329, %s331
      %p335 = scmp.eq.s32.totalorder %s33, 0
      %p336 = por %p334, %p335
      %p337 = scmp.ne.s32.totalorder %s329, %s331
      %p338 = scmp.eq.s32.totalorder %s38, 1
      %p339 = por %p337, %p338
      %p340 = scmp.ne.s32.totalorder %s331, %s332
      %p341 = scmp.eq.s32.totalorder %s38, 0
      %p342 = por %p340, %p341
      %p343 = scmp.ne.s32.totalorder %s331, %s332
      %p344 = scmp.eq.s32.totalorder %s39, 1
      %p345 = por %p343, %p344
      %p347 = scmp.ne.s32.totalorder %s332, %s346
      %p348 = scmp.eq.s32.totalorder %s39, 0
      %p349 = por %p347, %p348
      %s351 = sadd.s32 %s350, 1
      %p354 = scmp.eq.s32.totalorder %s33, 1
      %p355 = scmp.ne.s32.totalorder %s350, %s352
      %p356 = scmp.eq.s32.totalorder %s33, 0
      %p357 = por %p355, %p356
      %p358 = scmp.ne.s32.totalorder %s350, %s352
      %p359 = scmp.eq.s32.totalorder %s38, 1
      %p360 = por %p358, %p359
      %p361 = scmp.ne.s32.totalorder %s352, %s353
      %p362 = scmp.eq.s32.totalorder %s38, 0
      %p363 = por %p361, %p362
      %p364 = scmp.ne.s32.totalorder %s352, %s353
      %p365 = scmp.eq.s32.totalorder %s39, 1
      %p366 = por %p364, %p365
      %p368 = scmp.ne.s32.totalorder %s353, %s367
      %p369 = scmp.eq.s32.totalorder %s39, 0
      %p370 = por %p368, %p369
      %s371 = ssub.s32 %s40, %s52
      %s372 = ssub.s32 %s41, %s48
      %s373 = sor.u32 %s371, %s372
      %p374 = scmp.eq.s32.totalorder %s373, 0
      %s376 = sadd.s32 %s375, 1
      %s377 = scalar_select %p374, %s375, %s376
      %p380 = pneg %p374
      %p381 = scmp.eq.s32.totalorder %s33, 1
      %p382 = por %p380, %p381
      %p383 = scmp.ne.s32.totalorder %s375, %s378
      %p384 = scmp.eq.s32.totalorder %s33, 0
      %p385 = por %p383, %p384
      %p386 = scmp.ne.s32.totalorder %s375, %s378
      %p387 = scmp.eq.s32.totalorder %s38, 1
      %p388 = por %p386, %p387
      %p389 = scmp.ne.s32.totalorder %s378, %s379
      %p390 = scmp.eq.s32.totalorder %s38, 0
      %p391 = por %p389, %p390
      %p392 = scmp.ne.s32.totalorder %s378, %s379
      %p393 = scmp.eq.s32.totalorder %s39, 1
      %p394 = por %p392, %p393
      %p396 = scmp.ne.s32.totalorder %s379, %s395
      %p397 = scmp.eq.s32.totalorder %s39, 0
      %p398 = por %p396, %p397
      %p399 = scmp.le.s32.totalorder 1, %s33
      %p400 = scmp.lt.s32.totalorder %s33, 3
      %p401 = pnand %p399, %p400
      %p402 = pneg %p401
      // Predicated region
      $region9: #{tpu_custom_call.1} parent=5 // pred_check
        _
      $region10: #{tpu_custom_call.1} parent=5 // pred_check_branch
        %404 = sbr.rel (%p401) target = $region12
      $region11: #{tpu_custom_call.1} parent=5 // pred_region
        %s405 = ssub.s32 %s33, 1
        // Predicated region
        $region13: #{tpu_custom_call.1} parent=11 // pred_check
          %p406 = pneg %p174
        $region14: #{tpu_custom_call.1} parent=11 // pred_check_branch
          %408 = sbr.rel (%p406) target = $region16
        $region15: #{tpu_custom_call.1} parent=11 // pred_region
          %s410 = ssub.s32 512, 512
          %411 = vsyncadd [#allocation11], %s410
          %s412 = sshll.u32 [#allocation12], 4
          %s413 = int_to_ptr.vmem [resolvable:$true] %s412
          %418 = dma.hbm_to_vmem [thread:$0]  %s4, 512, %s413, [#allocation11], 128, 128, 8
        $region16: #{tpu_custom_call.1} parent=11 // pred_fallthru
          _
        // Predicated region
        $region17: #{tpu_custom_call.1} parent=11 // pred_check
          %p419 = pneg %p195
        $region18: #{tpu_custom_call.1} parent=11 // pred_check_branch
          %421 = sbr.rel (%p419) target = $region20
        $region19: #{tpu_custom_call.1} parent=11 // pred_region
          _
        $region20: #{tpu_custom_call.1} parent=11 // pred_fallthru
          _
        // Predicated region
        $region21: #{tpu_custom_call.1} parent=11 // pred_check
          %p422 = pneg %p216
        $region22: #{tpu_custom_call.1} parent=11 // pred_check_branch
          %424 = sbr.rel (%p422) target = $region24
        $region23: #{tpu_custom_call.1} parent=11 // pred_region
          %s426 = ssub.s32 512, 512
          %427 = vsyncadd [#allocation14], %s426
          %s428 = sshll.u32 [#allocation13], 4
          %s429 = int_to_ptr.vmem [resolvable:$true] %s428
          %434 = dma.hbm_to_vmem [thread:$0]  %s6, 512, %s429, [#allocation14], 128, 128, 8
        $region24: #{tpu_custom_call.1} parent=11 // pred_fallthru
          _
        // Predicated region
        $region25: #{tpu_custom_call.1} parent=11 // pred_check
          %p435 = pneg %p237
        $region26: #{tpu_custom_call.1} parent=11 // pred_check_branch
          %437 = sbr.rel (%p435) target = $region28
        $region27: #{tpu_custom_call.1} parent=11 // pred_region
          _
        $region28: #{tpu_custom_call.1} parent=11 // pred_fallthru
          _
        // Predicated region
        $region29: #{tpu_custom_call.1} parent=11 // pred_check
          %p438 = pneg %p258
        $region30: #{tpu_custom_call.1} parent=11 // pred_check_branch
          %440 = sbr.rel (%p438) target = $region32
        $region31: #{tpu_custom_call.1} parent=11 // pred_region
          %s442 = ssub.s32 512, 512
          %443 = vsyncadd [#allocation14], %s442
          %s444 = sshll.u32 [#allocation15], 4
          %s445 = int_to_ptr.vmem [resolvable:$true] %s444
          %450 = dma.hbm_to_vmem [thread:$0]  %s8, 512, %s445, [#allocation14], 128, 128, 8
        $region32: #{tpu_custom_call.1} parent=11 // pred_fallthru
          _
        // Predicated region
        $region33: #{tpu_custom_call.1} parent=11 // pred_check
          %p451 = pneg %p279
        $region34: #{tpu_custom_call.1} parent=11 // pred_check_branch
          %453 = sbr.rel (%p451) target = $region36
        $region35: #{tpu_custom_call.1} parent=11 // pred_region
          _
        $region36: #{tpu_custom_call.1} parent=11 // pred_fallthru
          _
        // Predicated region
        $region37: #{tpu_custom_call.1} parent=11 // pred_check
          %p454 = pneg %p300
        $region38: #{tpu_custom_call.1} parent=11 // pred_check_branch
          %456 = sbr.rel (%p454) target = $region40
        $region39: #{tpu_custom_call.1} parent=11 // pred_region
          _
        $region40: #{tpu_custom_call.1} parent=11 // pred_fallthru
          _
        // Predicated region
        $region41: #{tpu_custom_call.1} parent=11 // pred_check
          %p457 = pneg %p321
        $region42: #{tpu_custom_call.1} parent=11 // pred_check_branch
          %459 = sbr.rel (%p457) target = $region44
        $region43: #{tpu_custom_call.1} parent=11 // pred_region
          _
        $region44: #{tpu_custom_call.1} parent=11 // pred_fallthru
          _
        // Predicated region
        $region45: #{tpu_custom_call.1} parent=11 // pred_check
          %p460 = pneg %p342
        $region46: #{tpu_custom_call.1} parent=11 // pred_check_branch
          %462 = sbr.rel (%p460) target = $region48
        $region47: #{tpu_custom_call.1} parent=11 // pred_region
          _
        $region48: #{tpu_custom_call.1} parent=11 // pred_fallthru
          _
        // Predicated region
        $region49: #{tpu_custom_call.1} parent=11 // pred_check
          %p463 = pneg %p363
        $region50: #{tpu_custom_call.1} parent=11 // pred_check_branch
          %465 = sbr.rel (%p463) target = $region52
        $region51: #{tpu_custom_call.1} parent=11 // pred_region
          _
        $region52: #{tpu_custom_call.1} parent=11 // pred_fallthru
          _
      $region12: #{tpu_custom_call.1} parent=5 // pred_fallthru
        _
      %p466 = scmp.lt.s32.totalorder %s33, 2
      // Predicated region
      $region53: #{tpu_custom_call.1} parent=5 // pred_check
        %p467 = pneg %p466
      $region54: #{tpu_custom_call.1} parent=5 // pred_check_branch
        %469 = sbr.rel (%p467) target = $region56
      $region55: #{tpu_custom_call.1} parent=5 // pred_region
        // Predicated region
        $region57: #{tpu_custom_call.1} parent=55 // pred_check
          %p470 = pneg %p67
        $region58: #{tpu_custom_call.1} parent=55 // pred_check_branch
          %472 = sbr.rel (%p470) target = $region60
        $region59: #{tpu_custom_call.1} parent=55 // pred_region
          %s473 = sand.u32 %s57, 1
          %s474 = scalar_lea.sflag [#allocation5], %s473
          %s475 = sand.u32 %s57, 1
          %s476 = smul.addr %s475, 8
          %s477 = scalar_lea.vmem [#allocation4], %s476
          %s479 = ssub.s32 128, 128
          %480 = vsyncadd %s474, %s479
          %s481 = sadd.s32 %s41, %s40
          %s482 = smul.addr %s481, 128
          %s483 = scalar_lea.hbm %s0, %s482
          %s485 = sshll.u32 %s477, 4
          %s486 = int_to_ptr.vmem [resolvable:$true] %s485
          %488 = dma.hbm_to_vmem [thread:$0]  %s483, 128, %s486, %s474
        $region60: #{tpu_custom_call.1} parent=55 // pred_fallthru
          _
        // Predicated region
        $region61: #{tpu_custom_call.1} parent=55 // pred_check
          %p489 = pneg %p95
        $region62: #{tpu_custom_call.1} parent=55 // pred_check_branch
          %491 = sbr.rel (%p489) target = $region64
        $region63: #{tpu_custom_call.1} parent=55 // pred_region
          %s492 = sand.u32 %s33, 1
          %s493 = scalar_lea.sflag [#allocation8], %s492
          %s494 = sand.u32 %s85, 1
          %s495 = smul.addr %s494, 8
          %s496 = scalar_lea.vmem [#allocation7], %s495
          %s498 = ssub.s32 128, 128
          %499 = vsyncadd %s493, %s498
          %s500 = sadd.s32 %s41, %s40
          %s501 = smul.addr %s500, 128
          %s502 = scalar_lea.hbm %s1, %s501
          %s504 = sshll.u32 %s496, 4
          %s505 = int_to_ptr.vmem [resolvable:$true] %s504
          %507 = dma.hbm_to_vmem [thread:$0]  %s502, 128, %s505, %s493
        $region64: #{tpu_custom_call.1} parent=55 // pred_fallthru
          _
        // Predicated region
        $region65: #{tpu_custom_call.1} parent=55 // pred_check
          %p508 = pneg %p121
        $region66: #{tpu_custom_call.1} parent=55 // pred_check_branch
          %510 = sbr.rel (%p508) target = $region68
        $region67: #{tpu_custom_call.1} parent=55 // pred_region
          %s511 = sand.u32 %s33, 1
          %s512 = scalar_lea.sflag [#allocation8], %s511
          %s513 = sand.u32 %s111, 1
          %s514 = smul.addr %s513, 16
          %s515 = scalar_lea.vmem [#allocation9], %s514
          %s517 = ssub.s32 256, 256
          %518 = vsyncadd %s512, %s517
          %s519 = smul.addr %s40, 2
          %s520 = smul.addr %s519, 128
          %s521 = scalar_lea.hbm %s2, %s520
          %s522 = sshll.u32 %s515, 4
          %s523 = int_to_ptr.vmem [resolvable:$true] %s522
          %528 = dma.hbm_to_vmem [thread:$0]  %s521, 256, %s523, %s512, 128, 128, 8
        $region68: #{tpu_custom_call.1} parent=55 // pred_fallthru
          _
        // Predicated region
        $region69: #{tpu_custom_call.1} parent=55 // pred_check
          %p529 = pneg %p147
        $region70: #{tpu_custom_call.1} parent=55 // pred_check_branch
          %531 = sbr.rel (%p529) target = $region72
        $region71: #{tpu_custom_call.1} parent=55 // pred_region
          %s532 = sand.u32 %s33, 1
          %s533 = scalar_lea.sflag [#allocation11], %s532
          %s534 = sand.u32 %s137, 1
          %s535 = smul.addr %s534, 16
          %s536 = scalar_lea.vmem [#allocation10], %s535
          %s538 = ssub.s32 256, 256
          %539 = vsyncadd %s533, %s538
          %s540 = smul.addr %s40, 2
          %s541 = smul.addr %s540, 128
          %s542 = scalar_lea.hbm %s3, %s541
          %s543 = sshll.u32 %s536, 4
          %s544 = int_to_ptr.vmem [resolvable:$true] %s543
          %549 = dma.hbm_to_vmem [thread:$0]  %s542, 256, %s544, %s533, 128, 128, 8
        $region72: #{tpu_custom_call.1} parent=55 // pred_fallthru
          _
      $region56: #{tpu_custom_call.1} parent=5 // pred_fallthru
        _
      %p550 = scmp.le.s32.totalorder 1, %s33
      %p551 = scmp.lt.s32.totalorder %s33, 3
      %p552 = pnand %p550, %p551
      %p553 = pneg %p552
      // Predicated region
      $region73: #{tpu_custom_call.1} parent=5 // pred_check
        _
      $region74: #{tpu_custom_call.1} parent=5 // pred_check_branch
        %555 = sbr.rel (%p552) target = $region76
      $region75: #{tpu_custom_call.1} parent=5 // pred_region
        %s556 = ssub.s32 %s33, 1
        %s557 = sand.u32 %s60, 1
        %s558 = scalar_lea.sflag [#allocation5], %s557
        %s559 = sand.u32 %s60, 1
        %s560 = smul.addr %s559, 8
        %s561 = scalar_lea.vmem [#allocation4], %s560
        // Predicated region
        $region77: #{tpu_custom_call.1} parent=75 // pred_check
          %p562 = pneg %p73
        $region78: #{tpu_custom_call.1} parent=75 // pred_check_branch
          %564 = sbr.rel (%p562) target = $region80
        $region79: #{tpu_custom_call.1} parent=75 // pred_region
          %565 = dma.done %s558, 128
        $region80: #{tpu_custom_call.1} parent=75 // pred_fallthru
          _
        %s566 = sand.u32 %s38, 1
        %s567 = scalar_lea.sflag [#allocation8], %s566
        %s568 = sand.u32 %s88, 1
        %s569 = smul.addr %s568, 8
        %s570 = scalar_lea.vmem [#allocation7], %s569
        // Predicated region
        $region81: #{tpu_custom_call.1} parent=75 // pred_check
          %p571 = pneg %p101
        $region82: #{tpu_custom_call.1} parent=75 // pred_check_branch
          %573 = sbr.rel (%p571) target = $region84
        $region83: #{tpu_custom_call.1} parent=75 // pred_region
          %574 = dma.done %s567, 128
        $region84: #{tpu_custom_call.1} parent=75 // pred_fallthru
          _
        %s575 = sand.u32 %s38, 1
        %s576 = scalar_lea.sflag [#allocation8], %s575
        %s577 = sand.u32 %s114, 1
        %s578 = smul.addr %s577, 16
        %s579 = scalar_lea.vmem [#allocation9], %s578
        // Predicated region
        $region85: #{tpu_custom_call.1} parent=75 // pred_check
          %p580 = pneg %p127
        $region86: #{tpu_custom_call.1} parent=75 // pred_check_branch
          %582 = sbr.rel (%p580) target = $region88
        $region87: #{tpu_custom_call.1} parent=75 // pred_region
          %583 = dma.done %s576, 256
        $region88: #{tpu_custom_call.1} parent=75 // pred_fallthru
          _
        %s584 = sand.u32 %s38, 1
        %s585 = scalar_lea.sflag [#allocation11], %s584
        %s586 = sand.u32 %s140, 1
        %s587 = smul.addr %s586, 16
        %s588 = scalar_lea.vmem [#allocation10], %s587
        // Predicated region
        $region89: #{tpu_custom_call.1} parent=75 // pred_check
          %p589 = pneg %p153
        $region90: #{tpu_custom_call.1} parent=75 // pred_check_branch
          %591 = sbr.rel (%p589) target = $region92
        $region91: #{tpu_custom_call.1} parent=75 // pred_region
          %592 = dma.done %s585, 256
        $region92: #{tpu_custom_call.1} parent=75 // pred_fallthru
          _
        // Predicated region
        $region93: #{tpu_custom_call.1} parent=75 // pred_check
          %p593 = pneg %p174
        $region94: #{tpu_custom_call.1} parent=75 // pred_check_branch
          %595 = sbr.rel (%p593) target = $region96
        $region95: #{tpu_custom_call.1} parent=75 // pred_region
          %596 = dma.done [#allocation11], 512
        $region96: #{tpu_custom_call.1} parent=75 // pred_fallthru
          _
        // Predicated region
        $region97: #{tpu_custom_call.1} parent=75 // pred_check
          %p597 = pneg %p216
        $region98: #{tpu_custom_call.1} parent=75 // pred_check_branch
          %599 = sbr.rel (%p597) target = $region100
        $region99: #{tpu_custom_call.1} parent=75 // pred_region
          %600 = dma.done [#allocation14], 512
        $region100: #{tpu_custom_call.1} parent=75 // pred_fallthru
          _
        // Predicated region
        $region101: #{tpu_custom_call.1} parent=75 // pred_check
          %p601 = pneg %p258
        $region102: #{tpu_custom_call.1} parent=75 // pred_check_branch
          %603 = sbr.rel (%p601) target = $region104
        $region103: #{tpu_custom_call.1} parent=75 // pred_region
          %604 = dma.done [#allocation14], 512
        $region104: #{tpu_custom_call.1} parent=75 // pred_fallthru
          _
        %s605 = sand.u32 %s60, 1
        %s606 = scalar_lea.sflag [#allocation5], %s605
        %s607 = sand.u32 %s60, 1
        %s608 = smul.addr %s607, 8
        %s609 = scalar_lea.vmem [#allocation4], %s608
        %p610 = pneg %p73
        %p611 = pneg %p70
        %s612 = sand.u32 %s38, 1
        %s613 = scalar_lea.sflag [#allocation8], %s612
        %s614 = sand.u32 %s88, 1
        %s615 = smul.addr %s614, 8
        %s616 = scalar_lea.vmem [#allocation7], %s615
        %p617 = pneg %p101
        %p618 = pneg %p98
        %s619 = sand.u32 %s38, 1
        %s620 = scalar_lea.sflag [#allocation8], %s619
        %s621 = sand.u32 %s114, 1
        %s622 = smul.addr %s621, 16
        %s623 = scalar_lea.vmem [#allocation9], %s622
        %p624 = pneg %p127
        %p625 = pneg %p124
        %s626 = sand.u32 %s38, 1
        %s627 = scalar_lea.sflag [#allocation11], %s626
        %s628 = sand.u32 %s140, 1
        %s629 = smul.addr %s628, 16
        %s630 = scalar_lea.vmem [#allocation10], %s629
        %p631 = pneg %p153
        %p632 = pneg %p150
        %p633 = pneg %p174
        %p634 = pneg %p171
        %p635 = pneg %p195
        %p636 = pneg %p192
        %p637 = pneg %p216
        %p638 = pneg %p213
        %p639 = pneg %p237
        %p640 = pneg %p234
        %p641 = pneg %p258
        %p642 = pneg %p255
        %p643 = pneg %p279
        %p644 = pneg %p276
        %p645 = pneg %p300
        %p646 = pneg %p297
        %p647 = pneg %p321
        %p648 = pneg %p318
        %p649 = pneg %p342
        %p650 = pneg %p339
        %p651 = pneg %p363
        %p652 = pneg %p360
        %p653 = pneg %p391
        %p654 = pneg %p388
        %s655 = sand.u32 %s378, 1
        %s656 = scalar_lea.sflag [#allocation6], %s655
        %s657 = sand.u32 %s378, 1
        %s658 = smul.addr %s657, 8
        %s659 = scalar_lea.vmem [#allocation16], %s658
        %p660 = scmp.eq.s32.totalorder %s43, 0
        // Predicated region
        $region105: #{tpu_custom_call.1} parent=75 // pred_check
          %p661 = pneg %p660
        $region106: #{tpu_custom_call.1} parent=75 // pred_check_branch
          %663 = sbr.rel (%p661) target = $region108
        $region107: #{tpu_custom_call.1} parent=75 // pred_region
          %v664 = vld [vmem:[%s579] sm:$0xff]
          %v665 = vld [vmem:[%s579 + $0x8] sm:$0xff]
          %v666 = vld [vmem:[%s588] sm:$0xff]
          %v667 = vld [vmem:[%s588 + $0x8] sm:$0xff]
          %v668 = vld [vmem:[#allocation13] sm:$0xff]
          %v669 = vld [vmem:[#allocation13 + $0x8] sm:$0xff]
          %v670 = vld [vmem:[#allocation13 + $0x10] sm:$0xff]
          %v671 = vld [vmem:[#allocation13 + $0x18] sm:$0xff]
          %v672 = vld [vmem:[%s7] sm:$0x1]
          %v674 = vlaneseq
          %v675 = vshrl.u32 %v674, 7
          %v676 = vsub.s32 0, %v675
          %v677 = vrot.slane %v672, %v676
          %vm679 = vcmask 261120
          %v681 = vsel %vm679, %v664, 0
          %v684 = vsel %vm679, %v665, 0
          %686 = vmatprep.subr.mxu0 0.0
          %687 = vmatpush1.msra.mxu0 %v668
          %688 = vmatprep.subr.mxu0 0.0
          %689 = vmatpush1.msra.mxu0 %v669
          %690 = vmatprep.subr.mxu0 0.0
          %691 = vmatpush1.msra.mxu0 %v670
          %692 = vmatprep.subr.mxu0 0.0
          %693 = vmatpush1.msra.mxu0 %v671
          %694 = vmatprep.subr.mxu0 0.0
          %695 = vmatpush1.msra.mxu0 0.0
          %696 = vmatprep.subr.mxu0 0.0
          %697 = vmatpush1.msra.mxu0 0.0
          %698 = vmatprep.subr.mxu0 0.0
          %699 = vmatpush1.msra.mxu0 0.0
          %700 = vmatprep.subr.mxu0 0.0
          %701 = vmatpush1.msra.mxu0 0.0
          %702 = vmatprep.subr.mxu0 0.0
          %703 = vmatpush1.msra.mxu0 0.0
          %704 = vmatprep.subr.mxu0 0.0
          %705 = vmatpush1.msra.mxu0 0.0
          %706 = vmatprep.subr.mxu0 0.0
          %707 = vmatpush1.msra.mxu0 0.0
          %708 = vmatprep.subr.mxu0 0.0
          %709 = vmatpush1.msra.mxu0 0.0
          %710 = vmatprep.subr.mxu0 0.0
          %711 = vmatpush1.msra.mxu0 0.0
          %712 = vmatprep.subr.mxu0 0.0
          %713 = vmatpush1.msra.mxu0 0.0
          %714 = vmatprep.subr.mxu0 0.0
          %715 = vmatpush1.msra.mxu0 0.0
          %716 = vmatprep.subr.mxu0 0.0
          %717 = vmatpush1.msra.mxu0 0.0
          %718 = vmatprep.subr.mxu0 0.0
          %719 = vmatpush1.msra.mxu0 0.0
          %720 = vmatprep.subr.mxu0 0.0
          %721 = vmatpush1.msra.mxu0 0.0
          %722 = vmatprep.subr.mxu0 0.0
          %723 = vmatpush1.msra.mxu0 0.0
          %724 = vmatprep.subr.mxu0 0.0
          %725 = vmatpush1.msra.mxu0 0.0
          %726 = vmatprep.subr.mxu0 0.0
          %727 = vmatpush1.msra.mxu0 0.0
          %728 = vmatprep.subr.mxu0 0.0
          %729 = vmatpush1.msra.mxu0 0.0
          %730 = vmatprep.subr.mxu0 0.0
          %731 = vmatpush1.msra.mxu0 0.0
          %732 = vmatprep.subr.mxu0 0.0
          %733 = vmatpush1.msra.mxu0 0.0
          %734 = vmatprep.subr.mxu0 0.0
          %735 = vmatpush1.msra.mxu0 0.0
          %736 = vmatprep.subr.mxu0 0.0
          %737 = vmatpush1.msra.mxu0 0.0
          %738 = vmatprep.subr.mxu0 0.0
          %739 = vmatpush1.msra.mxu0 0.0
          %740 = vmatprep.subr.mxu0 0.0
          %741 = vmatpush1.msra.mxu0 0.0
          %742 = vmatprep.subr.mxu0 0.0
          %743 = vmatpush1.msra.mxu0 0.0
          %744 = vmatprep.subr.mxu0 0.0
          %745 = vmatpush1.msra.mxu0 0.0
          %746 = vmatprep.subr.mxu0 0.0
          %747 = vmatpush1.msra.mxu0 0.0
          %748 = vmatprep.subr.mxu0 0.0
          %749 = vmatpush1.msra.mxu0 0.0
          %750 = vmatprep.mubr.f32.mxu0 0.0
          %751 = vmatmul.mubr.f32.gmra.mrb[0].mxu0 %v681
          %v752 = vpop.f32.mrb[0].mxu0
          %v753 = vadd.f32 %v677, %v752
          %v754 = vpop.f32.mrb[0].mxu0
          %755 = vmatprep.mubr.f32.mxu0 0.0
          %756 = vmatmul.mubr.f32.gmra.mrb[0].mxu0 %v684
          %v757 = vpop.f32.mrb[0].mxu0
          %v758 = vadd.f32 %v677, %v757
          %v759 = vpop.f32.mrb[0].mxu0
          %760 = vdwg.mxu0
          %v761 = vld [vmem:[#allocation15] sm:$0xff]
          %v762 = vld [vmem:[#allocation15 + $0x8] sm:$0xff]
          %v763 = vld [vmem:[#allocation15 + $0x10] sm:$0xff]
          %v764 = vld [vmem:[#allocation15 + $0x18] sm:$0xff]
          %v765 = vld [vmem:[%s9] sm:$0x1]
          %v767 = vlaneseq
          %v768 = vshrl.u32 %v767, 7
          %v769 = vsub.s32 0, %v768
          %v770 = vrot.slane %v765, %v769
          %v773 = vsel %vm679, %v666, 0
          %v776 = vsel %vm679, %v667, 0
          %778 = vmatprep.subr.mxu0 0.0
          %779 = vmatpush1.msra.mxu0 %v761
          %780 = vmatprep.subr.mxu0 0.0
          %781 = vmatpush1.msra.mxu0 %v762
          %782 = vmatprep.subr.mxu0 0.0
          %783 = vmatpush1.msra.mxu0 %v763
          %784 = vmatprep.subr.mxu0 0.0
          %785 = vmatpush1.msra.mxu0 %v764
          %786 = vmatprep.subr.mxu0 0.0
          %787 = vmatpush1.msra.mxu0 0.0
          %788 = vmatprep.subr.mxu0 0.0
          %789 = vmatpush1.msra.mxu0 0.0
          %790 = vmatprep.subr.mxu0 0.0
          %791 = vmatpush1.msra.mxu0 0.0
          %792 = vmatprep.subr.mxu0 0.0
          %793 = vmatpush1.msra.mxu0 0.0
          %794 = vmatprep.subr.mxu0 0.0
          %795 = vmatpush1.msra.mxu0 0.0
          %796 = vmatprep.subr.mxu0 0.0
          %797 = vmatpush1.msra.mxu0 0.0
          %798 = vmatprep.subr.mxu0 0.0
          %799 = vmatpush1.msra.mxu0 0.0
          %800 = vmatprep.subr.mxu0 0.0
          %801 = vmatpush1.msra.mxu0 0.0
          %802 = vmatprep.subr.mxu0 0.0
          %803 = vmatpush1.msra.mxu0 0.0
          %804 = vmatprep.subr.mxu0 0.0
          %805 = vmatpush1.msra.mxu0 0.0
          %806 = vmatprep.subr.mxu0 0.0
          %807 = vmatpush1.msra.mxu0 0.0
          %808 = vmatprep.subr.mxu0 0.0
          %809 = vmatpush1.msra.mxu0 0.0
          %810 = vmatprep.subr.mxu0 0.0
          %811 = vmatpush1.msra.mxu0 0.0
          %812 = vmatprep.subr.mxu0 0.0
          %813 = vmatpush1.msra.mxu0 0.0
          %814 = vmatprep.subr.mxu0 0.0
          %815 = vmatpush1.msra.mxu0 0.0
          %816 = vmatprep.subr.mxu0 0.0
          %817 = vmatpush1.msra.mxu0 0.0
          %818 = vmatprep.subr.mxu0 0.0
          %819 = vmatpush1.msra.mxu0 0.0
          %820 = vmatprep.subr.mxu0 0.0
          %821 = vmatpush1.msra.mxu0 0.0
          %822 = vmatprep.subr.mxu0 0.0
          %823 = vmatpush1.msra.mxu0 0.0
          %824 = vmatprep.subr.mxu0 0.0
          %825 = vmatpush1.msra.mxu0 0.0
          %826 = vmatprep.subr.mxu0 0.0
          %827 = vmatpush1.msra.mxu0 0.0
          %828 = vmatprep.subr.mxu0 0.0
          %829 = vmatpush1.msra.mxu0 0.0
          %830 = vmatprep.subr.mxu0 0.0
          %831 = vmatpush1.msra.mxu0 0.0
          %832 = vmatprep.subr.mxu0 0.0
          %833 = vmatpush1.msra.mxu0 0.0
          %834 = vmatprep.subr.mxu0 0.0
          %835 = vmatpush1.msra.mxu0 0.0
          %836 = vmatprep.subr.mxu0 0.0
          %837 = vmatpush1.msra.mxu0 0.0
          %838 = vmatprep.subr.mxu0 0.0
          %839 = vmatpush1.msra.mxu0 0.0
          %840 = vmatprep.subr.mxu0 0.0
          %841 = vmatpush1.msra.mxu0 0.0
          %842 = vmatprep.mubr.f32.mxu0 0.0
          %843 = vmatmul.mubr.f32.gmra.mrb[0].mxu0 %v773
          %v844 = vpop.f32.mrb[0].mxu0
          %v845 = vadd.f32 %v770, %v844
          %v846 = vpop.f32.mrb[0].mxu0
          %847 = vmatprep.mubr.f32.mxu0 0.0
          %848 = vmatmul.mubr.f32.gmra.mrb[0].mxu0 %v776
          %v849 = vpop.f32.mrb[0].mxu0
          %v850 = vadd.f32 %v770, %v849
          %v851 = vpop.f32.mrb[0].mxu0
          %852 = vdwg.mxu0
          %853 = vst.msk [vmem:[#allocation2] sm:$0xff] %vm679, %v753
          %854 = vst.msk [vmem:[#allocation2 + $0x8] sm:$0xff] %vm679, %v758
          %855 = vst.msk [vmem:[#allocation3] sm:$0xff] %vm679, %v845
          %856 = vst.msk [vmem:[#allocation3 + $0x8] sm:$0xff] %vm679, %v850
        $region108: #{tpu_custom_call.1} parent=75 // pred_fallthru
          _
        %v857 = vld [vmem:[%s570] sm:$0xff]
        %v858 = vld [vmem:[#allocation12] sm:$0xff]
        %v859 = vld [vmem:[#allocation12 + $0x8] sm:$0xff]
        %v860 = vld [vmem:[#allocation12 + $0x10] sm:$0xff]
        %v861 = vld [vmem:[#allocation12 + $0x18] sm:$0xff]
        %v862 = vld [vmem:[%s5] sm:$0x1]
        %v864 = vlaneseq
        %v865 = vshrl.u32 %v864, 7
        %v866 = vsub.s32 0, %v865
        %v867 = vrot.slane %v862, %v866
        %vm869 = vcmask 261120
        %v871 = vsel %vm869, %v857, 0
        %873 = vmatprep.subr.mxu0 0.0
        %874 = vmatpush1.msra.mxu0 %v858
        %875 = vmatprep.subr.mxu0 0.0
        %876 = vmatpush1.msra.mxu0 %v859
        %877 = vmatprep.subr.mxu0 0.0
        %878 = vmatpush1.msra.mxu0 %v860
        %879 = vmatprep.subr.mxu0 0.0
        %880 = vmatpush1.msra.mxu0 %v861
        %881 = vmatprep.subr.mxu0 0.0
        %882 = vmatpush1.msra.mxu0 0.0
        %883 = vmatprep.subr.mxu0 0.0
        %884 = vmatpush1.msra.mxu0 0.0
        %885 = vmatprep.subr.mxu0 0.0
        %886 = vmatpush1.msra.mxu0 0.0
        %887 = vmatprep.subr.mxu0 0.0
        %888 = vmatpush1.msra.mxu0 0.0
        %889 = vmatprep.subr.mxu0 0.0
        %890 = vmatpush1.msra.mxu0 0.0
        %891 = vmatprep.subr.mxu0 0.0
        %892 = vmatpush1.msra.mxu0 0.0
        %893 = vmatprep.subr.mxu0 0.0
        %894 = vmatpush1.msra.mxu0 0.0
        %895 = vmatprep.subr.mxu0 0.0
        %896 = vmatpush1.msra.mxu0 0.0
        %897 = vmatprep.subr.mxu0 0.0
        %898 = vmatpush1.msra.mxu0 0.0
        %899 = vmatprep.subr.mxu0 0.0
        %900 = vmatpush1.msra.mxu0 0.0
        %901 = vmatprep.subr.mxu0 0.0
        %902 = vmatpush1.msra.mxu0 0.0
        %903 = vmatprep.subr.mxu0 0.0
        %904 = vmatpush1.msra.mxu0 0.0
        %905 = vmatprep.subr.mxu0 0.0
        %906 = vmatpush1.msra.mxu0 0.0
        %907 = vmatprep.subr.mxu0 0.0
        %908 = vmatpush1.msra.mxu0 0.0
        %909 = vmatprep.subr.mxu0 0.0
        %910 = vmatpush1.msra.mxu0 0.0
        %911 = vmatprep.subr.mxu0 0.0
        %912 = vmatpush1.msra.mxu0 0.0
        %913 = vmatprep.subr.mxu0 0.0
        %914 = vmatpush1.msra.mxu0 0.0
        %915 = vmatprep.subr.mxu0 0.0
        %916 = vmatpush1.msra.mxu0 0.0
        %917 = vmatprep.subr.mxu0 0.0
        %918 = vmatpush1.msra.mxu0 0.0
        %919 = vmatprep.subr.mxu0 0.0
        %920 = vmatpush1.msra.mxu0 0.0
        %921 = vmatprep.subr.mxu0 0.0
        %922 = vmatpush1.msra.mxu0 0.0
        %923 = vmatprep.subr.mxu0 0.0
        %924 = vmatpush1.msra.mxu0 0.0
        %925 = vmatprep.subr.mxu0 0.0
        %926 = vmatpush1.msra.mxu0 0.0
        %927 = vmatprep.subr.mxu0 0.0
        %928 = vmatpush1.msra.mxu0 0.0
        %929 = vmatprep.subr.mxu0 0.0
        %930 = vmatpush1.msra.mxu0 0.0
        %931 = vmatprep.subr.mxu0 0.0
        %932 = vmatpush1.msra.mxu0 0.0
        %933 = vmatprep.subr.mxu0 0.0
        %934 = vmatpush1.msra.mxu0 0.0
        %935 = vmatprep.subr.mxu0 0.0
        %936 = vmatpush1.msra.mxu0 0.0
        %937 = vmatprep.mubr.f32.mxu0 0.0
        %938 = vmatmul.mubr.f32.gmra.mrb[0].mxu0 %v871
        %v939 = vpop.f32.mrb[0].mxu0
        %v940 = vadd.f32 %v867, %v939
        %v941 = vpop.f32.mrb[0].mxu0
        %942 = vdwg.mxu0
        %v943 = vmul.f32 %v940, 0.35355338
        %v944 = vld [vmem:[#allocation2] sm:$0xff]
        %v945 = vld [vmem:[#allocation2 + $0x8] sm:$0xff]
        %v946 = vld [vmem:[#allocation3] sm:$0xff]
        %v947 = vld [vmem:[#allocation3 + $0x8] sm:$0xff]
        %v948 = vld [vmem:[%s10] sm:$0xff]
        %v949 = vld [vmem:[%s10 + $0x8] sm:$0xff]
        %v950 = vld [vmem:[%s10 + $0x10] sm:$0xff]
        %v951 = vld [vmem:[%s10 + $0x18] sm:$0xff]
        %v952 = vld [vmem:[%s11] sm:$0x1]
        %v954 = vlaneseq
        %v955 = vshrl.u32 %v954, 7
        %v956 = vsub.s32 0, %v955
        %v957 = vrot.slane %v952, %v956
        %v959 = vadd.f32 %v957, 0.0
        %vm960 = vcmask 64512
        %v962 = vsel %vm960, %v943, 0
        %v965 = vsel %vm960, %v944, 0
        %v968 = vsel %vm960, %v945, 0
        %970 = vmatprep.subr.mxu0 0.0
        %971 = vmatpush1.xpose.msra.mxu0 %v965
        %972 = vmatprep.subr.mxu0 0.0
        %973 = vmatpush1.xpose.msra.mxu0 %v968
        %974 = vmatprep.subr.mxu0 0.0
        %975 = vmatpush1.xpose.msra.mxu0 0.0
        %976 = vmatprep.subr.mxu0 0.0
        %977 = vmatpush1.xpose.msra.mxu0 0.0
        %978 = vmatprep.subr.mxu0 0.0
        %979 = vmatpush1.xpose.msra.mxu0 0.0
        %980 = vmatprep.subr.mxu0 0.0
        %981 = vmatpush1.xpose.msra.mxu0 0.0
        %982 = vmatprep.subr.mxu0 0.0
        %983 = vmatpush1.xpose.msra.mxu0 0.0
        %984 = vmatprep.subr.mxu0 0.0
        %985 = vmatpush1.xpose.msra.mxu0 0.0
        %986 = vmatprep.subr.mxu0 0.0
        %987 = vmatpush1.xpose.msra.mxu0 0.0
        %988 = vmatprep.subr.mxu0 0.0
        %989 = vmatpush1.xpose.msra.mxu0 0.0
        %990 = vmatprep.subr.mxu0 0.0
        %991 = vmatpush1.xpose.msra.mxu0 0.0
        %992 = vmatprep.subr.mxu0 0.0
        %993 = vmatpush1.xpose.msra.mxu0 0.0
        %994 = vmatprep.subr.mxu0 0.0
        %995 = vmatpush1.xpose.msra.mxu0 0.0
        %996 = vmatprep.subr.mxu0 0.0
        %997 = vmatpush1.xpose.msra.mxu0 0.0
        %998 = vmatprep.subr.mxu0 0.0
        %999 = vmatpush1.xpose.msra.mxu0 0.0
        %1000 = vmatprep.subr.mxu0 0.0
        %1001 = vmatpush1.xpose.msra.mxu0 0.0
        %1002 = vmatprep.subr.mxu0 0.0
        %1003 = vmatpush1.xpose.msra.mxu0 0.0
        %1004 = vmatprep.subr.mxu0 0.0
        %1005 = vmatpush1.xpose.msra.mxu0 0.0
        %1006 = vmatprep.subr.mxu0 0.0
        %1007 = vmatpush1.xpose.msra.mxu0 0.0
        %1008 = vmatprep.subr.mxu0 0.0
        %1009 = vmatpush1.xpose.msra.mxu0 0.0
        %1010 = vmatprep.subr.mxu0 0.0
        %1011 = vmatpush1.xpose.msra.mxu0 0.0
        %1012 = vmatprep.subr.mxu0 0.0
        %1013 = vmatpush1.xpose.msra.mxu0 0.0
        %1014 = vmatprep.subr.mxu0 0.0
        %1015 = vmatpush1.xpose.msra.mxu0 0.0
        %1016 = vmatprep.subr.mxu0 0.0
        %1017 = vmatpush1.xpose.msra.mxu0 0.0
        %1018 = vmatprep.subr.mxu0 0.0
        %1019 = vmatpush1.xpose.msra.mxu0 0.0
        %1020 = vmatprep.subr.mxu0 0.0
        %1021 = vmatpush1.xpose.msra.mxu0 0.0
        %1022 = vmatprep.subr.mxu0 0.0
        %1023 = vmatpush1.xpose.msra.mxu0 0.0
        %1024 = vmatprep.subr.mxu0 0.0
        %1025 = vmatpush1.xpose.msra.mxu0 0.0
        %1026 = vmatprep.subr.mxu0 0.0
        %1027 = vmatpush1.xpose.msra.mxu0 0.0
        %1028 = vmatprep.subr.mxu0 0.0
        %1029 = vmatpush1.xpose.msra.mxu0 0.0
        %1030 = vmatprep.subr.mxu0 0.0
        %1031 = vmatpush1.xpose.msra.mxu0 0.0
        %1032 = vmatprep.subr.mxu0 0.0
        %1033 = vmatpush1.xpose.msra.mxu0 0.0
        %1034 = vmatprep.mubr.f32.mxu0 0.0
        %1035 = vmatmul.mubr.f32.gmra.mrb[0].mxu0 %v962
        %v1036 = vpop.f32.mrb[0].mxu0
        %v1037 = vadd.f32 0.0, %v1036
        %v1038 = vpop.f32.mrb[0].mxu0
        %1039 = vdwg.mxu0
        %vm1040 = vcmask 130048
        %v1041 = vsel %vm1040, %v1037, -inf
        %1042 = vmax.xlane.f32.xlu0 %v1041
        %v1043 = vpop.xlane.xlu0 %1042
        %v1044 = vsub.f32 %v1037, %v1043
        %v1045 = vmul.f32 %v1044, 1.442695
        %v1046 = vpow.pop %v1045
        %v1047 = vsel %vm1040, %v1046, 0.0
        %1048 = vadd.xlane.f32.xlu0 %v1047
        %v1049 = vpop.xlane.xlu0 %1048
        %v1051 = vsel %vm1040, %v1046, 0
        %1053 = vmatprep.subr.mxu0 0.0
        %1054 = vmatpush1.msra.mxu0 %v946
        %1055 = vmatprep.subr.mxu0 0.0
        %1056 = vmatpush1.msra.mxu0 %v947
        %1057 = vmatprep.subr.mxu0 0.0
        %1058 = vmatpush1.msra.mxu0 0.0
        %1059 = vmatprep.subr.mxu0 0.0
        %1060 = vmatpush1.msra.mxu0 0.0
        %1061 = vmatprep.subr.mxu0 0.0
        %1062 = vmatpush1.msra.mxu0 0.0
        %1063 = vmatprep.subr.mxu0 0.0
        %1064 = vmatpush1.msra.mxu0 0.0
        %1065 = vmatprep.subr.mxu0 0.0
        %1066 = vmatpush1.msra.mxu0 0.0
        %1067 = vmatprep.subr.mxu0 0.0
        %1068 = vmatpush1.msra.mxu0 0.0
        %1069 = vmatprep.subr.mxu0 0.0
        %1070 = vmatpush1.msra.mxu0 0.0
        %1071 = vmatprep.subr.mxu0 0.0
        %1072 = vmatpush1.msra.mxu0 0.0
        %1073 = vmatprep.subr.mxu0 0.0
        %1074 = vmatpush1.msra.mxu0 0.0
        %1075 = vmatprep.subr.mxu0 0.0
        %1076 = vmatpush1.msra.mxu0 0.0
        %1077 = vmatprep.subr.mxu0 0.0
        %1078 = vmatpush1.msra.mxu0 0.0
        %1079 = vmatprep.subr.mxu0 0.0
        %1080 = vmatpush1.msra.mxu0 0.0
        %1081 = vmatprep.subr.mxu0 0.0
        %1082 = vmatpush1.msra.mxu0 0.0
        %1083 = vmatprep.subr.mxu0 0.0
        %1084 = vmatpush1.msra.mxu0 0.0
        %1085 = vmatprep.subr.mxu0 0.0
        %1086 = vmatpush1.msra.mxu0 0.0
        %1087 = vmatprep.subr.mxu0 0.0
        %1088 = vmatpush1.msra.mxu0 0.0
        %1089 = vmatprep.subr.mxu0 0.0
        %1090 = vmatpush1.msra.mxu0 0.0
        %1091 = vmatprep.subr.mxu0 0.0
        %1092 = vmatpush1.msra.mxu0 0.0
        %1093 = vmatprep.subr.mxu0 0.0
        %1094 = vmatpush1.msra.mxu0 0.0
        %1095 = vmatprep.subr.mxu0 0.0
        %1096 = vmatpush1.msra.mxu0 0.0
        %1097 = vmatprep.subr.mxu0 0.0
        %1098 = vmatpush1.msra.mxu0 0.0
        %1099 = vmatprep.subr.mxu0 0.0
        %1100 = vmatpush1.msra.mxu0 0.0
        %1101 = vmatprep.subr.mxu0 0.0
        %1102 = vmatpush1.msra.mxu0 0.0
        %1103 = vmatprep.subr.mxu0 0.0
        %1104 = vmatpush1.msra.mxu0 0.0
        %1105 = vmatprep.subr.mxu0 0.0
        %1106 = vmatpush1.msra.mxu0 0.0
        %1107 = vmatprep.subr.mxu0 0.0
        %1108 = vmatpush1.msra.mxu0 0.0
        %1109 = vmatprep.subr.mxu0 0.0
        %1110 = vmatpush1.msra.mxu0 0.0
        %1111 = vmatprep.subr.mxu0 0.0
        %1112 = vmatpush1.msra.mxu0 0.0
        %1113 = vmatprep.subr.mxu0 0.0
        %1114 = vmatpush1.msra.mxu0 0.0
        %1115 = vmatprep.subr.mxu0 0.0
        %1116 = vmatpush1.msra.mxu0 0.0
        %1117 = vmatprep.mubr.f32.mxu0 0.0
        %1118 = vmatmul.mubr.f32.gmra.mrb[0].mxu0 %v1051
        %v1119 = vpop.f32.mrb[0].mxu0
        %v1120 = vadd.f32 0.0, %v1119
        %v1121 = vpop.f32.mrb[0].mxu0
        %1122 = vdwg.mxu0
        %v1123 = vrcp.pop %v1049
        %v1124 = vmul.f32 %v1120, %v1123
        %v1126 = vsel %vm960, %v1124, 0
        %1128 = vmatprep.subr.mxu0 0.0
        %1129 = vmatpush1.msra.mxu0 %v948
        %1130 = vmatprep.subr.mxu0 0.0
        %1131 = vmatpush1.msra.mxu0 0.0
        %1132 = vmatprep.subr.mxu0 0.0
        %1133 = vmatpush1.msra.mxu0 0.0
        %1134 = vmatprep.subr.mxu0 0.0
        %1135 = vmatpush1.msra.mxu0 0.0
        %1136 = vmatprep.subr.mxu0 0.0
        %1137 = vmatpush1.msra.mxu0 0.0
        %1138 = vmatprep.subr.mxu0 0.0
        %1139 = vmatpush1.msra.mxu0 0.0
        %1140 = vmatprep.subr.mxu0 0.0
        %1141 = vmatpush1.msra.mxu0 0.0
        %1142 = vmatprep.subr.mxu0 0.0
        %1143 = vmatpush1.msra.mxu0 0.0
        %1144 = vmatprep.subr.mxu0 0.0
        %1145 = vmatpush1.msra.mxu0 0.0
        %1146 = vmatprep.subr.mxu0 0.0
        %1147 = vmatpush1.msra.mxu0 0.0
        %1148 = vmatprep.subr.mxu0 0.0
        %1149 = vmatpush1.msra.mxu0 0.0
        %1150 = vmatprep.subr.mxu0 0.0
        %1151 = vmatpush1.msra.mxu0 0.0
        %1152 = vmatprep.subr.mxu0 0.0
        %1153 = vmatpush1.msra.mxu0 0.0
        %1154 = vmatprep.subr.mxu0 0.0
        %1155 = vmatpush1.msra.mxu0 0.0
        %1156 = vmatprep.subr.mxu0 0.0
        %1157 = vmatpush1.msra.mxu0 0.0
        %1158 = vmatprep.subr.mxu0 0.0
        %1159 = vmatpush1.msra.mxu0 0.0
        %1160 = vmatprep.subr.mxu0 0.0
        %1161 = vmatpush1.msra.mxu0 0.0
        %1162 = vmatprep.subr.mxu0 0.0
        %1163 = vmatpush1.msra.mxu0 0.0
        %1164 = vmatprep.subr.mxu0 0.0
        %1165 = vmatpush1.msra.mxu0 0.0
        %1166 = vmatprep.subr.mxu0 0.0
        %1167 = vmatpush1.msra.mxu0 0.0
        %1168 = vmatprep.subr.mxu0 0.0
        %1169 = vmatpush1.msra.mxu0 0.0
        %1170 = vmatprep.subr.mxu0 0.0
        %1171 = vmatpush1.msra.mxu0 0.0
        %1172 = vmatprep.subr.mxu0 0.0
        %1173 = vmatpush1.msra.mxu0 0.0
        %1174 = vmatprep.subr.mxu0 0.0
        %1175 = vmatpush1.msra.mxu0 0.0
        %1176 = vmatprep.subr.mxu0 0.0
        %1177 = vmatpush1.msra.mxu0 0.0
        %1178 = vmatprep.subr.mxu0 0.0
        %1179 = vmatpush1.msra.mxu0 0.0
        %1180 = vmatprep.subr.mxu0 0.0
        %1181 = vmatpush1.msra.mxu0 0.0
        %1182 = vmatprep.subr.mxu0 0.0
        %1183 = vmatpush1.msra.mxu0 0.0
        %1184 = vmatprep.subr.mxu0 0.0
        %1185 = vmatpush1.msra.mxu0 0.0
        %1186 = vmatprep.subr.mxu0 0.0
        %1187 = vmatpush1.msra.mxu0 0.0
        %1188 = vmatprep.subr.mxu0 0.0
        %1189 = vmatpush1.msra.mxu0 0.0
        %1190 = vmatprep.subr.mxu0 0.0
        %1191 = vmatpush1.msra.mxu0 0.0
        %1192 = vmatprep.mubr.f32.mxu0 0.0
        %1193 = vmatmul.mubr.f32.gmra.mrb[0].mxu0 %v1126
        %v1194 = vpop.f32.mrb[0].mxu0
        %v1195 = vadd.f32 0.0, %v1194
        %v1196 = vpop.f32.mrb[0].mxu0
        %1197 = vdwg.mxu0
        %v1198 = vadd.f32 %v959, %v1195
        %1199 = vrot.lane.b32.xlu0 %v943, 120
        %v1200 = vpop.permute.xlu0 %1199
        %1201 = vrot.lane.b32.xlu0 %v944, 120
        %v1202 = vpop.permute.xlu0 %1201
        %1203 = vrot.lane.b32.xlu0 %v945, 120
        %v1204 = vpop.permute.xlu0 %1203
        %v1205 = vsel %vm960, %v1200, 0
        %v1207 = vsel %vm960, %v1202, 0
        %v1209 = vsel %vm960, %v1204, 0
        %1211 = vmatprep.subr.mxu0 0.0
        %1212 = vmatpush1.xpose.msra.mxu0 %v1207
        %1213 = vmatprep.subr.mxu0 0.0
        %1214 = vmatpush1.xpose.msra.mxu0 %v1209
        %1215 = vmatprep.subr.mxu0 0.0
        %1216 = vmatpush1.xpose.msra.mxu0 0.0
        %1217 = vmatprep.subr.mxu0 0.0
        %1218 = vmatpush1.xpose.msra.mxu0 0.0
        %1219 = vmatprep.subr.mxu0 0.0
        %1220 = vmatpush1.xpose.msra.mxu0 0.0
        %1221 = vmatprep.subr.mxu0 0.0
        %1222 = vmatpush1.xpose.msra.mxu0 0.0
        %1223 = vmatprep.subr.mxu0 0.0
        %1224 = vmatpush1.xpose.msra.mxu0 0.0
        %1225 = vmatprep.subr.mxu0 0.0
        %1226 = vmatpush1.xpose.msra.mxu0 0.0
        %1227 = vmatprep.subr.mxu0 0.0
        %1228 = vmatpush1.xpose.msra.mxu0 0.0
        %1229 = vmatprep.subr.mxu0 0.0
        %1230 = vmatpush1.xpose.msra.mxu0 0.0
        %1231 = vmatprep.subr.mxu0 0.0
        %1232 = vmatpush1.xpose.msra.mxu0 0.0
        %1233 = vmatprep.subr.mxu0 0.0
        %1234 = vmatpush1.xpose.msra.mxu0 0.0
        %1235 = vmatprep.subr.mxu0 0.0
        %1236 = vmatpush1.xpose.msra.mxu0 0.0
        %1237 = vmatprep.subr.mxu0 0.0
        %1238 = vmatpush1.xpose.msra.mxu0 0.0
        %1239 = vmatprep.subr.mxu0 0.0
        %1240 = vmatpush1.xpose.msra.mxu0 0.0
        %1241 = vmatprep.subr.mxu0 0.0
        %1242 = vmatpush1.xpose.msra.mxu0 0.0
        %1243 = vmatprep.subr.mxu0 0.0
        %1244 = vmatpush1.xpose.msra.mxu0 0.0
        %1245 = vmatprep.subr.mxu0 0.0
        %1246 = vmatpush1.xpose.msra.mxu0 0.0
        %1247 = vmatprep.subr.mxu0 0.0
        %1248 = vmatpush1.xpose.msra.mxu0 0.0
        %1249 = vmatprep.subr.mxu0 0.0
        %1250 = vmatpush1.xpose.msra.mxu0 0.0
        %1251 = vmatprep.subr.mxu0 0.0
        %1252 = vmatpush1.xpose.msra.mxu0 0.0
        %1253 = vmatprep.subr.mxu0 0.0
        %1254 = vmatpush1.xpose.msra.mxu0 0.0
        %1255 = vmatprep.subr.mxu0 0.0
        %1256 = vmatpush1.xpose.msra.mxu0 0.0
        %1257 = vmatprep.subr.mxu0 0.0
        %1258 = vmatpush1.xpose.msra.mxu0 0.0
        %1259 = vmatprep.subr.mxu0 0.0
        %1260 = vmatpush1.xpose.msra.mxu0 0.0
        %1261 = vmatprep.subr.mxu0 0.0
        %1262 = vmatpush1.xpose.msra.mxu0 0.0
        %1263 = vmatprep.subr.mxu0 0.0
        %1264 = vmatpush1.xpose.msra.mxu0 0.0
        %1265 = vmatprep.subr.mxu0 0.0
        %1266 = vmatpush1.xpose.msra.mxu0 0.0
        %1267 = vmatprep.subr.mxu0 0.0
        %1268 = vmatpush1.xpose.msra.mxu0 0.0
        %1269 = vmatprep.subr.mxu0 0.0
        %1270 = vmatpush1.xpose.msra.mxu0 0.0
        %1271 = vmatprep.subr.mxu0 0.0
        %1272 = vmatpush1.xpose.msra.mxu0 0.0
        %1273 = vmatprep.subr.mxu0 0.0
        %1274 = vmatpush1.xpose.msra.mxu0 0.0
        %1275 = vmatprep.mubr.f32.mxu0 0.0
        %1276 = vmatmul.mubr.f32.gmra.mrb[0].mxu0 %v1205
        %v1277 = vpop.f32.mrb[0].mxu0
        %v1278 = vadd.f32 0.0, %v1277
        %v1279 = vpop.f32.mrb[0].mxu0
        %1280 = vdwg.mxu0
        %v1281 = vsel %vm1040, %v1278, -inf
        %1282 = vmax.xlane.f32.xlu0 %v1281
        %v1283 = vpop.xlane.xlu0 %1282
        %v1284 = vsub.f32 %v1278, %v1283
        %v1285 = vmul.f32 %v1284, 1.442695
        %v1286 = vpow.pop %v1285
        %v1287 = vsel %vm1040, %v1286, 0.0
        %1288 = vadd.xlane.f32.xlu0 %v1287
        %v1289 = vpop.xlane.xlu0 %1288
        %1292 = vrot.lane.b32.xlu0 %v946, 120
        %v1293 = vpop.permute.xlu0 %1292
        %1294 = vrot.lane.b32.xlu0 %v947, 120
        %v1295 = vpop.permute.xlu0 %1294
        %v1299 = vsel %vm1040, %v1286, 0
        %1301 = vmatprep.subr.mxu0 0.0
        %1302 = vmatpush1.msra.mxu0 %v1293
        %1303 = vmatprep.subr.mxu0 0.0
        %1304 = vmatpush1.msra.mxu0 %v1295
        %1305 = vmatprep.subr.mxu0 0.0
        %1306 = vmatpush1.msra.mxu0 0.0
        %1307 = vmatprep.subr.mxu0 0.0
        %1308 = vmatpush1.msra.mxu0 0.0
        %1309 = vmatprep.subr.mxu0 0.0
        %1310 = vmatpush1.msra.mxu0 0.0
        %1311 = vmatprep.subr.mxu0 0.0
        %1312 = vmatpush1.msra.mxu0 0.0
        %1313 = vmatprep.subr.mxu0 0.0
        %1314 = vmatpush1.msra.mxu0 0.0
        %1315 = vmatprep.subr.mxu0 0.0
        %1316 = vmatpush1.msra.mxu0 0.0
        %1317 = vmatprep.subr.mxu0 0.0
        %1318 = vmatpush1.msra.mxu0 0.0
        %1319 = vmatprep.subr.mxu0 0.0
        %1320 = vmatpush1.msra.mxu0 0.0
        %1321 = vmatprep.subr.mxu0 0.0
        %1322 = vmatpush1.msra.mxu0 0.0
        %1323 = vmatprep.subr.mxu0 0.0
        %1324 = vmatpush1.msra.mxu0 0.0
        %1325 = vmatprep.subr.mxu0 0.0
        %1326 = vmatpush1.msra.mxu0 0.0
        %1327 = vmatprep.subr.mxu0 0.0
        %1328 = vmatpush1.msra.mxu0 0.0
        %1329 = vmatprep.subr.mxu0 0.0
        %1330 = vmatpush1.msra.mxu0 0.0
        %1331 = vmatprep.subr.mxu0 0.0
        %1332 = vmatpush1.msra.mxu0 0.0
        %1333 = vmatprep.subr.mxu0 0.0
        %1334 = vmatpush1.msra.mxu0 0.0
        %1335 = vmatprep.subr.mxu0 0.0
        %1336 = vmatpush1.msra.mxu0 0.0
        %1337 = vmatprep.subr.mxu0 0.0
        %1338 = vmatpush1.msra.mxu0 0.0
        %1339 = vmatprep.subr.mxu0 0.0
        %1340 = vmatpush1.msra.mxu0 0.0
        %1341 = vmatprep.subr.mxu0 0.0
        %1342 = vmatpush1.msra.mxu0 0.0
        %1343 = vmatprep.subr.mxu0 0.0
        %1344 = vmatpush1.msra.mxu0 0.0
        %1345 = vmatprep.subr.mxu0 0.0
        %1346 = vmatpush1.msra.mxu0 0.0
        %1347 = vmatprep.subr.mxu0 0.0
        %1348 = vmatpush1.msra.mxu0 0.0
        %1349 = vmatprep.subr.mxu0 0.0
        %1350 = vmatpush1.msra.mxu0 0.0
        %1351 = vmatprep.subr.mxu0 0.0
        %1352 = vmatpush1.msra.mxu0 0.0
        %1353 = vmatprep.subr.mxu0 0.0
        %1354 = vmatpush1.msra.mxu0 0.0
        %1355 = vmatprep.subr.mxu0 0.0
        %1356 = vmatpush1.msra.mxu0 0.0
        %1357 = vmatprep.subr.mxu0 0.0
        %1358 = vmatpush1.msra.mxu0 0.0
        %1359 = vmatprep.subr.mxu0 0.0
        %1360 = vmatpush1.msra.mxu0 0.0
        %1361 = vmatprep.subr.mxu0 0.0
        %1362 = vmatpush1.msra.mxu0 0.0
        %1363 = vmatprep.subr.mxu0 0.0
        %1364 = vmatpush1.msra.mxu0 0.0
        %1365 = vmatprep.mubr.f32.mxu0 0.0
        %1366 = vmatmul.mubr.f32.gmra.mrb[0].mxu0 %v1299
        %v1367 = vpop.f32.mrb[0].mxu0
        %v1368 = vadd.f32 0.0, %v1367
        %v1369 = vpop.f32.mrb[0].mxu0
        %1370 = vdwg.mxu0
        %v1371 = vrcp.pop %v1289
        %v1372 = vmul.f32 %v1368, %v1371
        %v1374 = vsel %vm960, %v1372, 0
        %1376 = vmatprep.subr.mxu0 0.0
        %1377 = vmatpush1.msra.mxu0 %v949
        %1378 = vmatprep.subr.mxu0 0.0
        %1379 = vmatpush1.msra.mxu0 0.0
        %1380 = vmatprep.subr.mxu0 0.0
        %1381 = vmatpush1.msra.mxu0 0.0
        %1382 = vmatprep.subr.mxu0 0.0
        %1383 = vmatpush1.msra.mxu0 0.0
        %1384 = vmatprep.subr.mxu0 0.0
        %1385 = vmatpush1.msra.mxu0 0.0
        %1386 = vmatprep.subr.mxu0 0.0
        %1387 = vmatpush1.msra.mxu0 0.0
        %1388 = vmatprep.subr.mxu0 0.0
        %1389 = vmatpush1.msra.mxu0 0.0
        %1390 = vmatprep.subr.mxu0 0.0
        %1391 = vmatpush1.msra.mxu0 0.0
        %1392 = vmatprep.subr.mxu0 0.0
        %1393 = vmatpush1.msra.mxu0 0.0
        %1394 = vmatprep.subr.mxu0 0.0
        %1395 = vmatpush1.msra.mxu0 0.0
        %1396 = vmatprep.subr.mxu0 0.0
        %1397 = vmatpush1.msra.mxu0 0.0
        %1398 = vmatprep.subr.mxu0 0.0
        %1399 = vmatpush1.msra.mxu0 0.0
        %1400 = vmatprep.subr.mxu0 0.0
        %1401 = vmatpush1.msra.mxu0 0.0
        %1402 = vmatprep.subr.mxu0 0.0
        %1403 = vmatpush1.msra.mxu0 0.0
        %1404 = vmatprep.subr.mxu0 0.0
        %1405 = vmatpush1.msra.mxu0 0.0
        %1406 = vmatprep.subr.mxu0 0.0
        %1407 = vmatpush1.msra.mxu0 0.0
        %1408 = vmatprep.subr.mxu0 0.0
        %1409 = vmatpush1.msra.mxu0 0.0
        %1410 = vmatprep.subr.mxu0 0.0
        %1411 = vmatpush1.msra.mxu0 0.0
        %1412 = vmatprep.subr.mxu0 0.0
        %1413 = vmatpush1.msra.mxu0 0.0
        %1414 = vmatprep.subr.mxu0 0.0
        %1415 = vmatpush1.msra.mxu0 0.0
        %1416 = vmatprep.subr.mxu0 0.0
        %1417 = vmatpush1.msra.mxu0 0.0
        %1418 = vmatprep.subr.mxu0 0.0
        %1419 = vmatpush1.msra.mxu0 0.0
        %1420 = vmatprep.subr.mxu0 0.0
        %1421 = vmatpush1.msra.mxu0 0.0
        %1422 = vmatprep.subr.mxu0 0.0
        %1423 = vmatpush1.msra.mxu0 0.0
        %1424 = vmatprep.subr.mxu0 0.0
        %1425 = vmatpush1.msra.mxu0 0.0
        %1426 = vmatprep.subr.mxu0 0.0
        %1427 = vmatpush1.msra.mxu0 0.0
        %1428 = vmatprep.subr.mxu0 0.0
        %1429 = vmatpush1.msra.mxu0 0.0
        %1430 = vmatprep.subr.mxu0 0.0
        %1431 = vmatpush1.msra.mxu0 0.0
        %1432 = vmatprep.subr.mxu0 0.0
        %1433 = vmatpush1.msra.mxu0 0.0
        %1434 = vmatprep.subr.mxu0 0.0
        %1435 = vmatpush1.msra.mxu0 0.0
        %1436 = vmatprep.subr.mxu0 0.0
        %1437 = vmatpush1.msra.mxu0 0.0
        %1438 = vmatprep.subr.mxu0 0.0
        %1439 = vmatpush1.msra.mxu0 0.0
        %1440 = vmatprep.mubr.f32.mxu0 0.0
        %1441 = vmatmul.mubr.f32.gmra.mrb[0].mxu0 %v1374
        %v1442 = vpop.f32.mrb[0].mxu0
        %v1443 = vadd.f32 0.0, %v1442
        %v1444 = vpop.f32.mrb[0].mxu0
        %1445 = vdwg.mxu0
        %v1446 = vadd.f32 %v1198, %v1443
        %1447 = vrot.lane.b32.xlu0 %v943, 112
        %v1448 = vpop.permute.xlu0 %1447
        %1449 = vrot.lane.b32.xlu0 %v944, 112
        %v1450 = vpop.permute.xlu0 %1449
        %1451 = vrot.lane.b32.xlu0 %v945, 112
        %v1452 = vpop.permute.xlu0 %1451
        %v1453 = vsel %vm960, %v1448, 0
        %v1455 = vsel %vm960, %v1450, 0
        %v1457 = vsel %vm960, %v1452, 0
        %1459 = vmatprep.subr.mxu0 0.0
        %1460 = vmatpush1.xpose.msra.mxu0 %v1455
        %1461 = vmatprep.subr.mxu0 0.0
        %1462 = vmatpush1.xpose.msra.mxu0 %v1457
        %1463 = vmatprep.subr.mxu0 0.0
        %1464 = vmatpush1.xpose.msra.mxu0 0.0
        %1465 = vmatprep.subr.mxu0 0.0
        %1466 = vmatpush1.xpose.msra.mxu0 0.0
        %1467 = vmatprep.subr.mxu0 0.0
        %1468 = vmatpush1.xpose.msra.mxu0 0.0
        %1469 = vmatprep.subr.mxu0 0.0
        %1470 = vmatpush1.xpose.msra.mxu0 0.0
        %1471 = vmatprep.subr.mxu0 0.0
        %1472 = vmatpush1.xpose.msra.mxu0 0.0
        %1473 = vmatprep.subr.mxu0 0.0
        %1474 = vmatpush1.xpose.msra.mxu0 0.0
        %1475 = vmatprep.subr.mxu0 0.0
        %1476 = vmatpush1.xpose.msra.mxu0 0.0
        %1477 = vmatprep.subr.mxu0 0.0
        %1478 = vmatpush1.xpose.msra.mxu0 0.0
        %1479 = vmatprep.subr.mxu0 0.0
        %1480 = vmatpush1.xpose.msra.mxu0 0.0
        %1481 = vmatprep.subr.mxu0 0.0
        %1482 = vmatpush1.xpose.msra.mxu0 0.0
        %1483 = vmatprep.subr.mxu0 0.0
        %1484 = vmatpush1.xpose.msra.mxu0 0.0
        %1485 = vmatprep.subr.mxu0 0.0
        %1486 = vmatpush1.xpose.msra.mxu0 0.0
        %1487 = vmatprep.subr.mxu0 0.0
        %1488 = vmatpush1.xpose.msra.mxu0 0.0
        %1489 = vmatprep.subr.mxu0 0.0
        %1490 = vmatpush1.xpose.msra.mxu0 0.0
        %1491 = vmatprep.subr.mxu0 0.0
        %1492 = vmatpush1.xpose.msra.mxu0 0.0
        %1493 = vmatprep.subr.mxu0 0.0
        %1494 = vmatpush1.xpose.msra.mxu0 0.0
        %1495 = vmatprep.subr.mxu0 0.0
        %1496 = vmatpush1.xpose.msra.mxu0 0.0
        %1497 = vmatprep.subr.mxu0 0.0
        %1498 = vmatpush1.xpose.msra.mxu0 0.0
        %1499 = vmatprep.subr.mxu0 0.0
        %1500 = vmatpush1.xpose.msra.mxu0 0.0
        %1501 = vmatprep.subr.mxu0 0.0
        %1502 = vmatpush1.xpose.msra.mxu0 0.0
        %1503 = vmatprep.subr.mxu0 0.0
        %1504 = vmatpush1.xpose.msra.mxu0 0.0
        %1505 = vmatprep.subr.mxu0 0.0
        %1506 = vmatpush1.xpose.msra.mxu0 0.0
        %1507 = vmatprep.subr.mxu0 0.0
        %1508 = vmatpush1.xpose.msra.mxu0 0.0
        %1509 = vmatprep.subr.mxu0 0.0
        %1510 = vmatpush1.xpose.msra.mxu0 0.0
        %1511 = vmatprep.subr.mxu0 0.0
        %1512 = vmatpush1.xpose.msra.mxu0 0.0
        %1513 = vmatprep.subr.mxu0 0.0
        %1514 = vmatpush1.xpose.msra.mxu0 0.0
        %1515 = vmatprep.subr.mxu0 0.0
        %1516 = vmatpush1.xpose.msra.mxu0 0.0
        %1517 = vmatprep.subr.mxu0 0.0
        %1518 = vmatpush1.xpose.msra.mxu0 0.0
        %1519 = vmatprep.subr.mxu0 0.0
        %1520 = vmatpush1.xpose.msra.mxu0 0.0
        %1521 = vmatprep.subr.mxu0 0.0
        %1522 = vmatpush1.xpose.msra.mxu0 0.0
        %1523 = vmatprep.mubr.f32.mxu0 0.0
        %1524 = vmatmul.mubr.f32.gmra.mrb[0].mxu0 %v1453
        %v1525 = vpop.f32.mrb[0].mxu0
        %v1526 = vadd.f32 0.0, %v1525
        %v1527 = vpop.f32.mrb[0].mxu0
        %1528 = vdwg.mxu0
        %v1529 = vsel %vm1040, %v1526, -inf
        %1530 = vmax.xlane.f32.xlu0 %v1529
        %v1531 = vpop.xlane.xlu0 %1530
        %v1532 = vsub.f32 %v1526, %v1531
        %v1533 = vmul.f32 %v1532, 1.442695
        %v1534 = vpow.pop %v1533
        %v1535 = vsel %vm1040, %v1534, 0.0
        %1536 = vadd.xlane.f32.xlu0 %v1535
        %v1537 = vpop.xlane.xlu0 %1536
        %1538 = vrot.lane.b32.xlu0 %v946, 112
        %v1539 = vpop.permute.xlu0 %1538
        %1540 = vrot.lane.b32.xlu0 %v947, 112
        %v1541 = vpop.permute.xlu0 %1540
        %v1545 = vsel %vm1040, %v1534, 0
        %1547 = vmatprep.subr.mxu0 0.0
        %1548 = vmatpush1.msra.mxu0 %v1539
        %1549 = vmatprep.subr.mxu0 0.0
        %1550 = vmatpush1.msra.mxu0 %v1541
        %1551 = vmatprep.subr.mxu0 0.0
        %1552 = vmatpush1.msra.mxu0 0.0
        %1553 = vmatprep.subr.mxu0 0.0
        %1554 = vmatpush1.msra.mxu0 0.0
        %1555 = vmatprep.subr.mxu0 0.0
        %1556 = vmatpush1.msra.mxu0 0.0
        %1557 = vmatprep.subr.mxu0 0.0
        %1558 = vmatpush1.msra.mxu0 0.0
        %1559 = vmatprep.subr.mxu0 0.0
        %1560 = vmatpush1.msra.mxu0 0.0
        %1561 = vmatprep.subr.mxu0 0.0
        %1562 = vmatpush1.msra.mxu0 0.0
        %1563 = vmatprep.subr.mxu0 0.0
        %1564 = vmatpush1.msra.mxu0 0.0
        %1565 = vmatprep.subr.mxu0 0.0
        %1566 = vmatpush1.msra.mxu0 0.0
        %1567 = vmatprep.subr.mxu0 0.0
        %1568 = vmatpush1.msra.mxu0 0.0
        %1569 = vmatprep.subr.mxu0 0.0
        %1570 = vmatpush1.msra.mxu0 0.0
        %1571 = vmatprep.subr.mxu0 0.0
        %1572 = vmatpush1.msra.mxu0 0.0
        %1573 = vmatprep.subr.mxu0 0.0
        %1574 = vmatpush1.msra.mxu0 0.0
        %1575 = vmatprep.subr.mxu0 0.0
        %1576 = vmatpush1.msra.mxu0 0.0
        %1577 = vmatprep.subr.mxu0 0.0
        %1578 = vmatpush1.msra.mxu0 0.0
        %1579 = vmatprep.subr.mxu0 0.0
        %1580 = vmatpush1.msra.mxu0 0.0
        %1581 = vmatprep.subr.mxu0 0.0
        %1582 = vmatpush1.msra.mxu0 0.0
        %1583 = vmatprep.subr.mxu0 0.0
        %1584 = vmatpush1.msra.mxu0 0.0
        %1585 = vmatprep.subr.mxu0 0.0
        %1586 = vmatpush1.msra.mxu0 0.0
        %1587 = vmatprep.subr.mxu0 0.0
        %1588 = vmatpush1.msra.mxu0 0.0
        %1589 = vmatprep.subr.mxu0 0.0
        %1590 = vmatpush1.msra.mxu0 0.0
        %1591 = vmatprep.subr.mxu0 0.0
        %1592 = vmatpush1.msra.mxu0 0.0
        %1593 = vmatprep.subr.mxu0 0.0
        %1594 = vmatpush1.msra.mxu0 0.0
        %1595 = vmatprep.subr.mxu0 0.0
        %1596 = vmatpush1.msra.mxu0 0.0
        %1597 = vmatprep.subr.mxu0 0.0
        %1598 = vmatpush1.msra.mxu0 0.0
        %1599 = vmatprep.subr.mxu0 0.0
        %1600 = vmatpush1.msra.mxu0 0.0
        %1601 = vmatprep.subr.mxu0 0.0
        %1602 = vmatpush1.msra.mxu0 0.0
        %1603 = vmatprep.subr.mxu0 0.0
        %1604 = vmatpush1.msra.mxu0 0.0
        %1605 = vmatprep.subr.mxu0 0.0
        %1606 = vmatpush1.msra.mxu0 0.0
        %1607 = vmatprep.subr.mxu0 0.0
        %1608 = vmatpush1.msra.mxu0 0.0
        %1609 = vmatprep.subr.mxu0 0.0
        %1610 = vmatpush1.msra.mxu0 0.0
        %1611 = vmatprep.mubr.f32.mxu0 0.0
        %1612 = vmatmul.mubr.f32.gmra.mrb[0].mxu0 %v1545
        %v1613 = vpop.f32.mrb[0].mxu0
        %v1614 = vadd.f32 0.0, %v1613
        %v1615 = vpop.f32.mrb[0].mxu0
        %1616 = vdwg.mxu0
        %v1617 = vrcp.pop %v1537
        %v1618 = vmul.f32 %v1614, %v1617
        %v1620 = vsel %vm960, %v1618, 0
        %1622 = vmatprep.subr.mxu0 0.0
        %1623 = vmatpush1.msra.mxu0 %v950
        %1624 = vmatprep.subr.mxu0 0.0
        %1625 = vmatpush1.msra.mxu0 0.0
        %1626 = vmatprep.subr.mxu0 0.0
        %1627 = vmatpush1.msra.mxu0 0.0
        %1628 = vmatprep.subr.mxu0 0.0
        %1629 = vmatpush1.msra.mxu0 0.0
        %1630 = vmatprep.subr.mxu0 0.0
        %1631 = vmatpush1.msra.mxu0 0.0
        %1632 = vmatprep.subr.mxu0 0.0
        %1633 = vmatpush1.msra.mxu0 0.0
        %1634 = vmatprep.subr.mxu0 0.0
        %1635 = vmatpush1.msra.mxu0 0.0
        %1636 = vmatprep.subr.mxu0 0.0
        %1637 = vmatpush1.msra.mxu0 0.0
        %1638 = vmatprep.subr.mxu0 0.0
        %1639 = vmatpush1.msra.mxu0 0.0
        %1640 = vmatprep.subr.mxu0 0.0
        %1641 = vmatpush1.msra.mxu0 0.0
        %1642 = vmatprep.subr.mxu0 0.0
        %1643 = vmatpush1.msra.mxu0 0.0
        %1644 = vmatprep.subr.mxu0 0.0
        %1645 = vmatpush1.msra.mxu0 0.0
        %1646 = vmatprep.subr.mxu0 0.0
        %1647 = vmatpush1.msra.mxu0 0.0
        %1648 = vmatprep.subr.mxu0 0.0
        %1649 = vmatpush1.msra.mxu0 0.0
        %1650 = vmatprep.subr.mxu0 0.0
        %1651 = vmatpush1.msra.mxu0 0.0
        %1652 = vmatprep.subr.mxu0 0.0
        %1653 = vmatpush1.msra.mxu0 0.0
        %1654 = vmatprep.subr.mxu0 0.0
        %1655 = vmatpush1.msra.mxu0 0.0
        %1656 = vmatprep.subr.mxu0 0.0
        %1657 = vmatpush1.msra.mxu0 0.0
        %1658 = vmatprep.subr.mxu0 0.0
        %1659 = vmatpush1.msra.mxu0 0.0
        %1660 = vmatprep.subr.mxu0 0.0
        %1661 = vmatpush1.msra.mxu0 0.0
        %1662 = vmatprep.subr.mxu0 0.0
        %1663 = vmatpush1.msra.mxu0 0.0
        %1664 = vmatprep.subr.mxu0 0.0
        %1665 = vmatpush1.msra.mxu0 0.0
        %1666 = vmatprep.subr.mxu0 0.0
        %1667 = vmatpush1.msra.mxu0 0.0
        %1668 = vmatprep.subr.mxu0 0.0
        %1669 = vmatpush1.msra.mxu0 0.0
        %1670 = vmatprep.subr.mxu0 0.0
        %1671 = vmatpush1.msra.mxu0 0.0
        %1672 = vmatprep.subr.mxu0 0.0
        %1673 = vmatpush1.msra.mxu0 0.0
        %1674 = vmatprep.subr.mxu0 0.0
        %1675 = vmatpush1.msra.mxu0 0.0
        %1676 = vmatprep.subr.mxu0 0.0
        %1677 = vmatpush1.msra.mxu0 0.0
        %1678 = vmatprep.subr.mxu0 0.0
        %1679 = vmatpush1.msra.mxu0 0.0
        %1680 = vmatprep.subr.mxu0 0.0
        %1681 = vmatpush1.msra.mxu0 0.0
        %1682 = vmatprep.subr.mxu0 0.0
        %1683 = vmatpush1.msra.mxu0 0.0
        %1684 = vmatprep.subr.mxu0 0.0
        %1685 = vmatpush1.msra.mxu0 0.0
        %1686 = vmatprep.mubr.f32.mxu0 0.0
        %1687 = vmatmul.mubr.f32.gmra.mrb[0].mxu0 %v1620
        %v1688 = vpop.f32.mrb[0].mxu0
        %v1689 = vadd.f32 0.0, %v1688
        %v1690 = vpop.f32.mrb[0].mxu0
        %1691 = vdwg.mxu0
        %v1692 = vadd.f32 %v1446, %v1689
        %1693 = vrot.lane.b32.xlu0 %v943, 104
        %v1694 = vpop.permute.xlu0 %1693
        %1695 = vrot.lane.b32.xlu0 %v944, 104
        %v1696 = vpop.permute.xlu0 %1695
        %1697 = vrot.lane.b32.xlu0 %v945, 104
        %v1698 = vpop.permute.xlu0 %1697
        %v1699 = vsel %vm960, %v1694, 0
        %v1701 = vsel %vm960, %v1696, 0
        %v1703 = vsel %vm960, %v1698, 0
        %1705 = vmatprep.subr.mxu0 0.0
        %1706 = vmatpush1.xpose.msra.mxu0 %v1701
        %1707 = vmatprep.subr.mxu0 0.0
        %1708 = vmatpush1.xpose.msra.mxu0 %v1703
        %1709 = vmatprep.subr.mxu0 0.0
        %1710 = vmatpush1.xpose.msra.mxu0 0.0
        %1711 = vmatprep.subr.mxu0 0.0
        %1712 = vmatpush1.xpose.msra.mxu0 0.0
        %1713 = vmatprep.subr.mxu0 0.0
        %1714 = vmatpush1.xpose.msra.mxu0 0.0
        %1715 = vmatprep.subr.mxu0 0.0
        %1716 = vmatpush1.xpose.msra.mxu0 0.0
        %1717 = vmatprep.subr.mxu0 0.0
        %1718 = vmatpush1.xpose.msra.mxu0 0.0
        %1719 = vmatprep.subr.mxu0 0.0
        %1720 = vmatpush1.xpose.msra.mxu0 0.0
        %1721 = vmatprep.subr.mxu0 0.0
        %1722 = vmatpush1.xpose.msra.mxu0 0.0
        %1723 = vmatprep.subr.mxu0 0.0
        %1724 = vmatpush1.xpose.msra.mxu0 0.0
        %1725 = vmatprep.subr.mxu0 0.0
        %1726 = vmatpush1.xpose.msra.mxu0 0.0
        %1727 = vmatprep.subr.mxu0 0.0
        %1728 = vmatpush1.xpose.msra.mxu0 0.0
        %1729 = vmatprep.subr.mxu0 0.0
        %1730 = vmatpush1.xpose.msra.mxu0 0.0
        %1731 = vmatprep.subr.mxu0 0.0
        %1732 = vmatpush1.xpose.msra.mxu0 0.0
        %1733 = vmatprep.subr.mxu0 0.0
        %1734 = vmatpush1.xpose.msra.mxu0 0.0
        %1735 = vmatprep.subr.mxu0 0.0
        %1736 = vmatpush1.xpose.msra.mxu0 0.0
        %1737 = vmatprep.subr.mxu0 0.0
        %1738 = vmatpush1.xpose.msra.mxu0 0.0
        %1739 = vmatprep.subr.mxu0 0.0
        %1740 = vmatpush1.xpose.msra.mxu0 0.0
        %1741 = vmatprep.subr.mxu0 0.0
        %1742 = vmatpush1.xpose.msra.mxu0 0.0
        %1743 = vmatprep.subr.mxu0 0.0
        %1744 = vmatpush1.xpose.msra.mxu0 0.0
        %1745 = vmatprep.subr.mxu0 0.0
        %1746 = vmatpush1.xpose.msra.mxu0 0.0
        %1747 = vmatprep.subr.mxu0 0.0
        %1748 = vmatpush1.xpose.msra.mxu0 0.0
        %1749 = vmatprep.subr.mxu0 0.0
        %1750 = vmatpush1.xpose.msra.mxu0 0.0
        %1751 = vmatprep.subr.mxu0 0.0
        %1752 = vmatpush1.xpose.msra.mxu0 0.0
        %1753 = vmatprep.subr.mxu0 0.0
        %1754 = vmatpush1.xpose.msra.mxu0 0.0
        %1755 = vmatprep.subr.mxu0 0.0
        %1756 = vmatpush1.xpose.msra.mxu0 0.0
        %1757 = vmatprep.subr.mxu0 0.0
        %1758 = vmatpush1.xpose.msra.mxu0 0.0
        %1759 = vmatprep.subr.mxu0 0.0
        %1760 = vmatpush1.xpose.msra.mxu0 0.0
        %1761 = vmatprep.subr.mxu0 0.0
        %1762 = vmatpush1.xpose.msra.mxu0 0.0
        %1763 = vmatprep.subr.mxu0 0.0
        %1764 = vmatpush1.xpose.msra.mxu0 0.0
        %1765 = vmatprep.subr.mxu0 0.0
        %1766 = vmatpush1.xpose.msra.mxu0 0.0
        %1767 = vmatprep.subr.mxu0 0.0
        %1768 = vmatpush1.xpose.msra.mxu0 0.0
        %1769 = vmatprep.mubr.f32.mxu0 0.0
        %1770 = vmatmul.mubr.f32.gmra.mrb[0].mxu0 %v1699
        %v1771 = vpop.f32.mrb[0].mxu0
        %v1772 = vadd.f32 0.0, %v1771
        %v1773 = vpop.f32.mrb[0].mxu0
        %1774 = vdwg.mxu0
        %v1775 = vsel %vm1040, %v1772, -inf
        %1776 = vmax.xlane.f32.xlu0 %v1775
        %v1777 = vpop.xlane.xlu0 %1776
        %v1778 = vsub.f32 %v1772, %v1777
        %v1779 = vmul.f32 %v1778, 1.442695
        %v1780 = vpow.pop %v1779
        %v1781 = vsel %vm1040, %v1780, 0.0
        %1782 = vadd.xlane.f32.xlu0 %v1781
        %v1783 = vpop.xlane.xlu0 %1782
        %1784 = vrot.lane.b32.xlu0 %v946, 104
        %v1785 = vpop.permute.xlu0 %1784
        %1786 = vrot.lane.b32.xlu0 %v947, 104
        %v1787 = vpop.permute.xlu0 %1786
        %v1791 = vsel %vm1040, %v1780, 0
        %1793 = vmatprep.subr.mxu0 0.0
        %1794 = vmatpush1.msra.mxu0 %v1785
        %1795 = vmatprep.subr.mxu0 0.0
        %1796 = vmatpush1.msra.mxu0 %v1787
        %1797 = vmatprep.subr.mxu0 0.0
        %1798 = vmatpush1.msra.mxu0 0.0
        %1799 = vmatprep.subr.mxu0 0.0
        %1800 = vmatpush1.msra.mxu0 0.0
        %1801 = vmatprep.subr.mxu0 0.0
        %1802 = vmatpush1.msra.mxu0 0.0
        %1803 = vmatprep.subr.mxu0 0.0
        %1804 = vmatpush1.msra.mxu0 0.0
        %1805 = vmatprep.subr.mxu0 0.0
        %1806 = vmatpush1.msra.mxu0 0.0
        %1807 = vmatprep.subr.mxu0 0.0
        %1808 = vmatpush1.msra.mxu0 0.0
        %1809 = vmatprep.subr.mxu0 0.0
        %1810 = vmatpush1.msra.mxu0 0.0
        %1811 = vmatprep.subr.mxu0 0.0
        %1812 = vmatpush1.msra.mxu0 0.0
        %1813 = vmatprep.subr.mxu0 0.0
        %1814 = vmatpush1.msra.mxu0 0.0
        %1815 = vmatprep.subr.mxu0 0.0
        %1816 = vmatpush1.msra.mxu0 0.0
        %1817 = vmatprep.subr.mxu0 0.0
        %1818 = vmatpush1.msra.mxu0 0.0
        %1819 = vmatprep.subr.mxu0 0.0
        %1820 = vmatpush1.msra.mxu0 0.0
        %1821 = vmatprep.subr.mxu0 0.0
        %1822 = vmatpush1.msra.mxu0 0.0
        %1823 = vmatprep.subr.mxu0 0.0
        %1824 = vmatpush1.msra.mxu0 0.0
        %1825 = vmatprep.subr.mxu0 0.0
        %1826 = vmatpush1.msra.mxu0 0.0
        %1827 = vmatprep.subr.mxu0 0.0
        %1828 = vmatpush1.msra.mxu0 0.0
        %1829 = vmatprep.subr.mxu0 0.0
        %1830 = vmatpush1.msra.mxu0 0.0
        %1831 = vmatprep.subr.mxu0 0.0
        %1832 = vmatpush1.msra.mxu0 0.0
        %1833 = vmatprep.subr.mxu0 0.0
        %1834 = vmatpush1.msra.mxu0 0.0
        %1835 = vmatprep.subr.mxu0 0.0
        %1836 = vmatpush1.msra.mxu0 0.0
        %1837 = vmatprep.subr.mxu0 0.0
        %1838 = vmatpush1.msra.mxu0 0.0
        %1839 = vmatprep.subr.mxu0 0.0
        %1840 = vmatpush1.msra.mxu0 0.0
        %1841 = vmatprep.subr.mxu0 0.0
        %1842 = vmatpush1.msra.mxu0 0.0
        %1843 = vmatprep.subr.mxu0 0.0
        %1844 = vmatpush1.msra.mxu0 0.0
        %1845 = vmatprep.subr.mxu0 0.0
        %1846 = vmatpush1.msra.mxu0 0.0
        %1847 = vmatprep.subr.mxu0 0.0
        %1848 = vmatpush1.msra.mxu0 0.0
        %1849 = vmatprep.subr.mxu0 0.0
        %1850 = vmatpush1.msra.mxu0 0.0
        %1851 = vmatprep.subr.mxu0 0.0
        %1852 = vmatpush1.msra.mxu0 0.0
        %1853 = vmatprep.subr.mxu0 0.0
        %1854 = vmatpush1.msra.mxu0 0.0
        %1855 = vmatprep.subr.mxu0 0.0
        %1856 = vmatpush1.msra.mxu0 0.0
        %1857 = vmatprep.mubr.f32.mxu0 0.0
        %1858 = vmatmul.mubr.f32.gmra.mrb[0].mxu0 %v1791
        %v1859 = vpop.f32.mrb[0].mxu0
        %v1860 = vadd.f32 0.0, %v1859
        %v1861 = vpop.f32.mrb[0].mxu0
        %1862 = vdwg.mxu0
        %v1863 = vrcp.pop %v1783
        %v1864 = vmul.f32 %v1860, %v1863
        %v1866 = vsel %vm960, %v1864, 0
        %1868 = vmatprep.subr.mxu0 0.0
        %1869 = vmatpush1.msra.mxu0 %v951
        %1870 = vmatprep.subr.mxu0 0.0
        %1871 = vmatpush1.msra.mxu0 0.0
        %1872 = vmatprep.subr.mxu0 0.0
        %1873 = vmatpush1.msra.mxu0 0.0
        %1874 = vmatprep.subr.mxu0 0.0
        %1875 = vmatpush1.msra.mxu0 0.0
        %1876 = vmatprep.subr.mxu0 0.0
        %1877 = vmatpush1.msra.mxu0 0.0
        %1878 = vmatprep.subr.mxu0 0.0
        %1879 = vmatpush1.msra.mxu0 0.0
        %1880 = vmatprep.subr.mxu0 0.0
        %1881 = vmatpush1.msra.mxu0 0.0
        %1882 = vmatprep.subr.mxu0 0.0
        %1883 = vmatpush1.msra.mxu0 0.0
        %1884 = vmatprep.subr.mxu0 0.0
        %1885 = vmatpush1.msra.mxu0 0.0
        %1886 = vmatprep.subr.mxu0 0.0
        %1887 = vmatpush1.msra.mxu0 0.0
        %1888 = vmatprep.subr.mxu0 0.0
        %1889 = vmatpush1.msra.mxu0 0.0
        %1890 = vmatprep.subr.mxu0 0.0
        %1891 = vmatpush1.msra.mxu0 0.0
        %1892 = vmatprep.subr.mxu0 0.0
        %1893 = vmatpush1.msra.mxu0 0.0
        %1894 = vmatprep.subr.mxu0 0.0
        %1895 = vmatpush1.msra.mxu0 0.0
        %1896 = vmatprep.subr.mxu0 0.0
        %1897 = vmatpush1.msra.mxu0 0.0
        %1898 = vmatprep.subr.mxu0 0.0
        %1899 = vmatpush1.msra.mxu0 0.0
        %1900 = vmatprep.subr.mxu0 0.0
        %1901 = vmatpush1.msra.mxu0 0.0
        %1902 = vmatprep.subr.mxu0 0.0
        %1903 = vmatpush1.msra.mxu0 0.0
        %1904 = vmatprep.subr.mxu0 0.0
        %1905 = vmatpush1.msra.mxu0 0.0
        %1906 = vmatprep.subr.mxu0 0.0
        %1907 = vmatpush1.msra.mxu0 0.0
        %1908 = vmatprep.subr.mxu0 0.0
        %1909 = vmatpush1.msra.mxu0 0.0
        %1910 = vmatprep.subr.mxu0 0.0
        %1911 = vmatpush1.msra.mxu0 0.0
        %1912 = vmatprep.subr.mxu0 0.0
        %1913 = vmatpush1.msra.mxu0 0.0
        %1914 = vmatprep.subr.mxu0 0.0
        %1915 = vmatpush1.msra.mxu0 0.0
        %1916 = vmatprep.subr.mxu0 0.0
        %1917 = vmatpush1.msra.mxu0 0.0
        %1918 = vmatprep.subr.mxu0 0.0
        %1919 = vmatpush1.msra.mxu0 0.0
        %1920 = vmatprep.subr.mxu0 0.0
        %1921 = vmatpush1.msra.mxu0 0.0
        %1922 = vmatprep.subr.mxu0 0.0
        %1923 = vmatpush1.msra.mxu0 0.0
        %1924 = vmatprep.subr.mxu0 0.0
        %1925 = vmatpush1.msra.mxu0 0.0
        %1926 = vmatprep.subr.mxu0 0.0
        %1927 = vmatpush1.msra.mxu0 0.0
        %1928 = vmatprep.subr.mxu0 0.0
        %1929 = vmatpush1.msra.mxu0 0.0
        %1930 = vmatprep.subr.mxu0 0.0
        %1931 = vmatpush1.msra.mxu0 0.0
        %1932 = vmatprep.mubr.f32.mxu0 0.0
        %1933 = vmatmul.mubr.f32.gmra.mrb[0].mxu0 %v1866
        %v1934 = vpop.f32.mrb[0].mxu0
        %v1935 = vadd.f32 0.0, %v1934
        %v1936 = vpop.f32.mrb[0].mxu0
        %1937 = vdwg.mxu0
        %v1938 = vadd.f32 %v1692, %v1935
        %v1939 = vld [vmem:[%s561] sm:$0xff]
        %v1940 = vadd.f32 %v1939, %v1938
        %v1941 = vsel %vm869, %v1940, 0.0
        %1942 = vadd.xlane.f32.xlu0 %v1941
        %v1943 = vpop.xlane.xlu0 %1942
        %v1944 = vmul.f32 %v1940, %v1940
        %v1945 = vsel %vm869, %v1944, 0.0
        %1946 = vadd.xlane.f32.xlu0 %v1945
        %v1947 = vpop.xlane.xlu0 %1946
        %v1948 = vmul.f32 %v1943, 0.03125
        %v1949 = vmul.f32 %v1947, 0.03125
        %v1950 = vmul.f32 %v1948, %v1948
        %v1951 = vsub.f32 %v1949, %v1950
        %v1952 = vmax.f32 %v1951, 0.0
        %v1953 = vsub.f32 %v1940, %v1948
        %v1954 = vadd.f32 %v1952, 1e-05
        %v1955 = vrsqrt.pop %v1954
        %v1956 = vmul.f32 %v1953, %v1955
        %v1957 = vld [vmem:[%s12] sm:$0x1]
        %v1959 = vlaneseq
        %v1960 = vshrl.u32 %v1959, 7
        %v1961 = vsub.s32 0, %v1960
        %v1962 = vrot.slane %v1957, %v1961
        %v1964 = vmul.f32 %v1956, %v1962
        %v1965 = vld [vmem:[%s13] sm:$0x1]
        %v1967 = vlaneseq
        %v1968 = vshrl.u32 %v1967, 7
        %v1969 = vsub.s32 0, %v1968
        %v1970 = vrot.slane %v1965, %v1969
        %v1972 = vadd.f32 %v1964, %v1970
        %1973 = vst.msk [vmem:[%s659] sm:$0xff] %vm869, %v1972
        %s1974 = sand.u32 %s378, 1
        %s1975 = scalar_lea.sflag [#allocation6], %s1974
        %s1976 = sand.u32 %s378, 1
        %s1977 = smul.addr %s1976, 8
        %s1978 = scalar_lea.vmem [#allocation16], %s1977
        // Predicated region
        $region109: #{tpu_custom_call.1} parent=75 // pred_check
          %p1979 = pneg %p388
        $region110: #{tpu_custom_call.1} parent=75 // pred_check_branch
          %1981 = sbr.rel (%p1979) target = $region112
        $region111: #{tpu_custom_call.1} parent=75 // pred_region
          %s1983 = ssub.s32 128, 128
          %1984 = vsyncadd %s1975, %s1983
          %s1985 = sadd.s32 %s43, %s42
          %s1986 = smul.addr %s1985, 128
          %s1987 = scalar_lea.hbm %s14, %s1986
          %s1989 = sshll.u32 %s1978, 4
          %s1990 = int_to_ptr.vmem [resolvable:$true] %s1989
          %1992 = dma.vmem_to_hbm [thread:$0]  %s1990, 128, %s1987, %s1975
        $region112: #{tpu_custom_call.1} parent=75 // pred_fallthru
          _
      $region76: #{tpu_custom_call.1} parent=5 // pred_fallthru
        _
      %p1993 = scmp.le.s32.totalorder 2, %s33
      // Predicated region
      $region113: #{tpu_custom_call.1} parent=5 // pred_check
        %p1994 = pneg %p1993
      $region114: #{tpu_custom_call.1} parent=5 // pred_check_branch
        %1996 = sbr.rel (%p1994) target = $region116
      $region115: #{tpu_custom_call.1} parent=5 // pred_region
        %s1997 = ssub.s32 %s33, 2
        // Predicated region
        $region117: #{tpu_custom_call.1} parent=115 // pred_check
          %p1998 = pneg %p394
        $region118: #{tpu_custom_call.1} parent=115 // pred_check_branch
          %2000 = sbr.rel (%p1998) target = $region120
        $region119: #{tpu_custom_call.1} parent=115 // pred_region
          %s2001 = sand.u32 %s379, 1
          %s2002 = scalar_lea.sflag [#allocation6], %s2001
          %s2003 = sand.u32 %s379, 1
          %s2004 = smul.addr %s2003, 8
          %s2005 = scalar_lea.vmem [#allocation16], %s2004
          %2006 = dma.done %s2002, 128
        $region120: #{tpu_custom_call.1} parent=115 // pred_fallthru
          _
      $region116: #{tpu_custom_call.1} parent=5 // pred_fallthru
        _
    $region6: #{tpu_custom_call.1} parent=1 // loop_footer
      %s37 = sadd.s32 1, %s33
    $region7: #{tpu_custom_call.1} parent=1 // loop_footer_branch
      %32 = sbr.rel target = $region3
    $region8: #{tpu_custom_call.1} parent=1 // loop_exit
      _
    %2007 = vsyncpa [#allocation5], 1
    %s2008 = scalar_lea.sflag [#allocation5], 1
    %2009 = vsyncpa %s2008, 1
    %2010 = vsyncpa [#allocation8], 1
    %s2011 = scalar_lea.sflag [#allocation8], 1
    %2012 = vsyncpa %s2011, 1
    %2013 = vsyncpa [#allocation11], 1
    %s2014 = scalar_lea.sflag [#allocation11], 1
    %2015 = vsyncpa %s2014, 1
    %2016 = vsyncpa [#allocation14], 1
    %2017 = vsyncpa [#allocation6], 1
    %s2018 = scalar_lea.sflag [#allocation6], 1
    %2019 = vsyncpa %s2018, 1

</llo_original>
